<compile_context>
chip_gen: v7x
topology: tpu7x:2x2x1
jax: 0.10.0
libtpu: 0.0.40
codegen_flags: <defaults>
</compile_context>

<pallas_src>
import jax
import jax.numpy as jnp
from jax import lax
from jax.experimental import pallas as pl
from jax.experimental.pallas import tpu as pltpu

# ----------------------- model hyper-parameters (small) -----------------------
D_MODEL = 32
N_HEADS = 4
D_K = D_MODEL // N_HEADS
PATCH_SIZE = 4
N_PATCHES = 4                        # per side
N_SEQ = N_PATCHES * N_PATCHES        # 16 tokens per image
P_DIM = 3 * PATCH_SIZE * PATCH_SIZE  # 48 patch features
P_PAD = 128                          # lane-padded patch features (full vreg / MXU K)
IMG = N_PATCHES * PATCH_SIZE         # 16
PACK = 4                             # token-quarters packed per 128-lane output row


def image_encoder_kernel(patches_ref, wc_ref, posb_ref, wqkv_ref, wo_ref, out_ref):
    M = patches_ref.shape[0]          # TB * N_SEQ tokens in this grid step
    TB = M // N_SEQ
    BH = TB * N_HEADS
    MQ = M // PACK

    # Patchify conv == one (TB*S, 128) @ (128, D) matmul (K zero-padded 48->128,
    # so loads are full unmasked vld and K matches the MXU's native depth).
    # Conv bias + positional embedding are pre-folded into posb (S, D) host-side
    # and added here with a broadcast over the TB images (no host-side tiling,
    # no extra HBM write/read of an (M, D) bias slab).
    x = jnp.dot(patches_ref[...], wc_ref[...], preferred_element_type=jnp.float32)
    x = (x.reshape(TB, N_SEQ, D_MODEL) + posb_ref[...]).reshape(M, D_MODEL)

    # Fused QKV projection (single MXU push); 1/sqrt(d_k) folded into Q columns.
    qkv = jnp.dot(x, wqkv_ref[...], preferred_element_type=jnp.float32)   # (M, 3D)
    qkv3 = qkv.reshape(TB, N_SEQ, 3 * D_MODEL)

    # Head-batched attention: gather per-head slabs into one (TB*H, S, dk) batch
    # (leading-axis concat -> no extra lane relayout beyond the head slices), so
    # the scores / softmax / PV path is 2 batched dot_generals + 1 softmax
    # instead of a 4-way per-head Python loop of tiny matmuls.
    def gather_heads(base):
        return jnp.concatenate(
            [qkv3[:, :, base + h * D_K: base + (h + 1) * D_K] for h in range(N_HEADS)],
            axis=0)                                                       # (BH, S, dk)

    qh = gather_heads(0)
    kh = gather_heads(D_MODEL)
    vh = gather_heads(2 * D_MODEL)

    # NOTE: the PyTorch "decoder" mask is torch.randn(n,n).bool(); randn is
    # nonzero with probability 1, so mask==0 is all-False and masked_fill is a
    # no-op.  We therefore apply no mask (matching the module almost surely).
    s = lax.dot_general(qh, kh, (((2,), (2,)), ((0,), (0,))),
                        preferred_element_type=jnp.float32)               # (BH, S, S)
    s = s - jnp.max(s, axis=-1, keepdims=True)
    e = jnp.exp(s)
    w = e * pl.reciprocal(jnp.sum(e, axis=-1, keepdims=True), approx=True)
    o = lax.dot_general(w, vh, (((2,), (1,)), ((0,), (0,))),
                        preferred_element_type=jnp.float32)               # (BH, S, dk)

    # Merge heads back along lanes ((h, dk)-major, matching wo row order) and run
    # ONE (M, 32) @ (32, 32) output projection (single K=32 MXU push instead of
    # four K=8 accumulate pushes + VPU adds).
    o = o.reshape(N_HEADS, M, D_K)
    o_cat = jnp.concatenate([o[h] for h in range(N_HEADS)], axis=-1)      # (M, D)
    out = jnp.dot(o_cat, wo_ref[...], preferred_element_type=jnp.float32)  # (M, D)

    # Lane-dense store: pack the 4 token-quarters side by side so the output
    # block's last dim is 128 (unmasked vst instead of masked vst.msk).  Row r,
    # lane-chunk j holds block-token j*MQ + r; the wrapper undoes the packing.
    out_ref[...] = jnp.concatenate(
        [out[j * MQ:(j + 1) * MQ, :] for j in range(PACK)], axis=-1
    ).astype(out_ref.dtype)


def extract_patches(x):
    """(B, 3, H, W) NCHW -> (B, S, 3*ps*ps), patch features in (c, kh, kw) order."""
    B = x.shape[0]
    x = x.reshape(B, 3, N_PATCHES, PATCH_SIZE, N_PATCHES, PATCH_SIZE)
    x = x.transpose(0, 2, 4, 1, 3, 5)             # (B, np, np, 3, ps, ps)
    return x.reshape(B, N_SEQ, P_DIM)


def pick_block_batch(B):
    """Images folded into one grid step.

    Feedback-driven: target ~1K token rows per step so the ~0.35 us fixed
    per-step pipeline overhead is amortized, and do NOT force >= 2 grid steps
    (that only matters for v7x's 2 TensorCores and must never shrink M below
    the sweet spot -- for larger B the grid naturally has multiple steps that
    "parallel" semantics shard across cores).  VMEM is not a constraint at
    these sizes on any generation (v5e/v6e 128 MiB, v7x 64 MiB)."""
    cap = max(1, 1024 // N_SEQ)       # 64 images == 1024 token rows per step
    return min(B, cap)


@jax.jit
def image_encoder(x, kparams):
    wc, posb, wqkv, wo = kparams
    B = x.shape[0]
    patches = extract_patches(x).astype(jnp.float32)             # (B, S, 48)

    TB = pick_block_batch(B)
    G = -(-B // TB)                    # grid steps (cdiv)
    B_pad = G * TB                     # pad B to a multiple of TB (no divisor-search
                                       # degeneration to tiny TB for awkward B)
    if B_pad != B:
        patches = jnp.concatenate(
            [patches, jnp.zeros((B_pad - B, N_SEQ, P_DIM), patches.dtype)], axis=0)
    M = TB * N_SEQ                     # token rows per grid step

    # Token-major slab, zero lane-padded 48 -> 128.
    patches2d = patches.reshape(B_pad * N_SEQ, P_DIM)
    patches2d = jnp.pad(patches2d, ((0, 0), (0, P_PAD - P_DIM)))

    out_wide = pl.pallas_call(
        image_encoder_kernel,
        out_shape=jax.ShapeDtypeStruct((B_pad * N_SEQ // PACK, PACK * D_MODEL),
                                       jnp.float32),
        grid_spec=pltpu.PrefetchScalarGridSpec(
            num_scalar_prefetch=0,
            grid=(G,),
            in_specs=[
                pl.BlockSpec((M, P_PAD), lambda b: (b, 0)),
                pl.BlockSpec((P_PAD, D_MODEL), lambda b: (0, 0)),
                pl.BlockSpec((N_SEQ, D_MODEL), lambda b: (0, 0)),
                pl.BlockSpec((D_MODEL, 3 * D_MODEL), lambda b: (0, 0)),
                pl.BlockSpec((D_MODEL, D_MODEL), lambda b: (0, 0)),
            ],
            out_specs=pl.BlockSpec((M // PACK, PACK * D_MODEL), lambda b: (b, 0)),
        ),
        compiler_params=pltpu.CompilerParams(
            dimension_semantics=("parallel",)),
    )(patches2d, wc, posb, wqkv, wo)

    # Undo the in-kernel lane-dense packing: within each grid block, lane-chunk j
    # of row r holds block-token j*(M//4) + r.
    out = out_wide.reshape(G, M // PACK, PACK, D_MODEL)
    out = out.transpose(0, 2, 1, 3).reshape(B_pad, N_SEQ, D_MODEL)
    return out[:B]


def init_raw_params(key):
    """Parameters in PyTorch layout: Conv2d weight/bias, pos, Linear (out, in)."""
    ks = jax.random.split(key, 6)
    conv_w = jax.random.normal(ks[0], (D_MODEL, 3, PATCH_SIZE, PATCH_SIZE),
                               jnp.float32) * 0.05
    conv_b = jax.random.normal(ks[1], (D_MODEL,), jnp.float32) * 0.05
    pos = jnp.zeros((1, N_SEQ, D_MODEL), jnp.float32)   # nn.Parameter(torch.zeros)
    wq = jax.random.normal(ks[2], (D_MODEL, D_MODEL), jnp.float32) * 0.05
    wk = jax.random.normal(ks[3], (D_MODEL, D_MODEL), jnp.float32) * 0.05
    wv = jax.random.normal(ks[4], (D_MODEL, D_MODEL), jnp.float32) * 0.05
    wo = jax.random.normal(ks[5], (D_MODEL, D_MODEL), jnp.float32) * 0.05
    return (conv_w, conv_b, pos, wq, wk, wv, wo)


def prepare_kernel_params(raw):
    """Host-side folding: conv weight -> (P_PAD, D) with zero K-padding,
    bias+pos -> (S, D), fused QKV (D, 3D) with 1/sqrt(d_k) folded into Q,
    wo -> (D, D) as (in, out)."""
    conv_w, conv_b, pos, wq, wk, wv, wo = raw
    wc = conv_w.reshape(D_MODEL, P_DIM).T                        # (48, D)
    wc = jnp.pad(wc, ((0, P_PAD - P_DIM), (0, 0)))               # (128, D), zero rows
    posb = pos[0] + conv_b[None, :]                              # (S, D)
    scale = 1.0 / jnp.sqrt(jnp.float32(D_K))
    wqkv = jnp.concatenate([wq.T * scale, wk.T, wv.T], axis=1)   # (D, 3D)
    return (wc, posb, wqkv, wo.T)


def reference(x, raw):
    """Pure-JAX reference of the PyTorch forward (no mask, see NOTE in kernel)."""
    conv_w, conv_b, pos, wq, wk, wv, wo = raw
    patches = extract_patches(x)
    wc = conv_w.reshape(D_MODEL, P_DIM).T
    xt = patches @ wc + conv_b[None, None, :] + pos              # (B, S, D)
    q = xt @ wq.T
    k = xt @ wk.T
    v = xt @ wv.T
    B = xt.shape[0]
    qh = q.reshape(B, N_SEQ, N_HEADS, D_K).transpose(0, 2, 1, 3)
    kh = k.reshape(B, N_SEQ, N_HEADS, D_K).transpose(0, 2, 1, 3)
    vh = v.reshape(B, N_SEQ, N_HEADS, D_K).transpose(0, 2, 1, 3)
    s = jnp.einsum("bhqd,bhkd->bhqk", qh, kh) / jnp.sqrt(jnp.float32(D_K))
    w = jax.nn.softmax(s, axis=-1)
    o = jnp.einsum("bhqk,bhkd->bhqd", w, vh)
    o = o.transpose(0, 2, 1, 3).reshape(B, N_SEQ, D_MODEL)
    return o @ wo.T


if __name__ == "__main__":
    key = jax.random.PRNGKey(0)
    k_x, k_p = jax.random.split(key)
    x = jax.random.normal(k_x, (2, 3, IMG, IMG), jnp.float32)   # NCHW image input
    raw = init_raw_params(k_p)
    kparams = prepare_kernel_params(raw)

    out = image_encoder(x, kparams)
    out = jax.block_until_ready(out)

    ref = reference(x, raw)
    assert out.shape == (2, N_SEQ, D_MODEL)
    # approx=True reciprocal in the softmax -> slightly looser tolerance vs f32 ref.
    assert jnp.allclose(out, ref, atol=2e-3, rtol=2e-3), "mismatch vs reference"
    print("KERNEL_OK")
</pallas_src>

<mosaic_0001>
module attributes {stable_mosaic.version = 11 : i64} {
  func.func @image_encoder_kernel(%arg0: i32, %arg1: memref<32x128xf32, #tpu.memory_space<vmem>>, %arg2: memref<128x32xf32, #tpu.memory_space<vmem>>, %arg3: memref<16x32xf32, #tpu.memory_space<vmem>>, %arg4: memref<32x96xf32, #tpu.memory_space<vmem>>, %arg5: memref<32x32xf32, #tpu.memory_space<vmem>>, %arg6: memref<8x128xf32, #tpu.memory_space<vmem>>) attributes {dimension_semantics = [#tpu.dimension_semantics<parallel>], iteration_bounds = array<i64: 1>, scalar_prefetch = 0 : i64, scratch_operands = 0 : i64, tpu.core_type = #tpu.core_type<tc>, window_params = [{transform_indices = @transform_0, window_bounds = array<i64: 32, 128>}, {pipeline_mode = #tpu.pipeline_mode<synchronous>, transform_indices = @transform_1, window_bounds = array<i64: 128, 32>}, {pipeline_mode = #tpu.pipeline_mode<synchronous>, transform_indices = @transform_2, window_bounds = array<i64: 16, 32>}, {pipeline_mode = #tpu.pipeline_mode<synchronous>, transform_indices = @transform_3, window_bounds = array<i64: 32, 96>}, {pipeline_mode = #tpu.pipeline_mode<synchronous>, transform_indices = @transform_4, window_bounds = array<i64: 32, 32>}, {transform_indices = @transform_5, window_bounds = array<i64: 8, 128>}]} {
    %c0 = arith.constant 0 : index
    %c0_0 = arith.constant 0 : index
    %0 = vector.load %arg1[%c0, %c0_0] : memref<32x128xf32, #tpu.memory_space<vmem>>, vector<32x128xf32>
    %c0_1 = arith.constant 0 : index
    %c0_2 = arith.constant 0 : index
    %1 = vector.load %arg2[%c0_1, %c0_2] : memref<128x32xf32, #tpu.memory_space<vmem>>, vector<128x32xf32>
    %cst = arith.constant dense<0.000000e+00> : vector<32x32xf32>
    %2 = tpu.matmul %0, %1, %cst {dimension_numbers = #tpu.dot_dimension_numbers<[1], [0], [0], [1], [0, 0, 1, 1], [], []>} : vector<32x128xf32>, vector<128x32xf32>, vector<32x32xf32> -> vector<32x32xf32>
    %3 = vector.shape_cast %2 : vector<32x32xf32> to vector<2x16x32xf32>
    %c0_3 = arith.constant 0 : index
    %c0_4 = arith.constant 0 : index
    %4 = vector.load %arg3[%c0_3, %c0_4] : memref<16x32xf32, #tpu.memory_space<vmem>>, vector<16x32xf32>
    %5 = vector.shape_cast %4 : vector<16x32xf32> to vector<1x16x32xf32>
    %6 = vector.broadcast %5 : vector<1x16x32xf32> to vector<2x16x32xf32>
    %7 = arith.addf %3, %6 : vector<2x16x32xf32>
    %8 = vector.shape_cast %7 : vector<2x16x32xf32> to vector<32x32xf32>
    %c0_5 = arith.constant 0 : index
    %c0_6 = arith.constant 0 : index
    %9 = vector.load %arg4[%c0_5, %c0_6] : memref<32x96xf32, #tpu.memory_space<vmem>>, vector<32x96xf32>
    %cst_7 = arith.constant dense<0.000000e+00> : vector<32x96xf32>
    %10 = tpu.matmul %8, %9, %cst_7 {dimension_numbers = #tpu.dot_dimension_numbers<[1], [0], [0], [1], [0, 0, 1, 1], [], []>} : vector<32x32xf32>, vector<32x96xf32>, vector<32x96xf32> -> vector<32x96xf32>
    %11 = vector.shape_cast %10 : vector<32x96xf32> to vector<2x16x96xf32>
    %12 = vector.extract_strided_slice %11 {offsets = [0, 0, 0], sizes = [2, 16, 8], strides = [1, 1, 1]} : vector<2x16x96xf32> to vector<2x16x8xf32>
    %13 = vector.extract_strided_slice %11 {offsets = [0, 0, 8], sizes = [2, 16, 8], strides = [1, 1, 1]} : vector<2x16x96xf32> to vector<2x16x8xf32>
    %14 = vector.extract_strided_slice %11 {offsets = [0, 0, 16], sizes = [2, 16, 8], strides = [1, 1, 1]} : vector<2x16x96xf32> to vector<2x16x8xf32>
    %15 = vector.extract_strided_slice %11 {offsets = [0, 0, 24], sizes = [2, 16, 8], strides = [1, 1, 1]} : vector<2x16x96xf32> to vector<2x16x8xf32>
    %16 = tpu.concatenate %12, %13, %14, %15 in 0 : vector<2x16x8xf32>, vector<2x16x8xf32>, vector<2x16x8xf32>, vector<2x16x8xf32> -> vector<8x16x8xf32>
    %17 = vector.extract_strided_slice %11 {offsets = [0, 0, 32], sizes = [2, 16, 8], strides = [1, 1, 1]} : vector<2x16x96xf32> to vector<2x16x8xf32>
    %18 = vector.extract_strided_slice %11 {offsets = [0, 0, 40], sizes = [2, 16, 8], strides = [1, 1, 1]} : vector<2x16x96xf32> to vector<2x16x8xf32>
    %19 = vector.extract_strided_slice %11 {offsets = [0, 0, 48], sizes = [2, 16, 8], strides = [1, 1, 1]} : vector<2x16x96xf32> to vector<2x16x8xf32>
    %20 = vector.extract_strided_slice %11 {offsets = [0, 0, 56], sizes = [2, 16, 8], strides = [1, 1, 1]} : vector<2x16x96xf32> to vector<2x16x8xf32>
    %21 = tpu.concatenate %17, %18, %19, %20 in 0 : vector<2x16x8xf32>, vector<2x16x8xf32>, vector<2x16x8xf32>, vector<2x16x8xf32> -> vector<8x16x8xf32>
    %22 = vector.extract_strided_slice %11 {offsets = [0, 0, 64], sizes = [2, 16, 8], strides = [1, 1, 1]} : vector<2x16x96xf32> to vector<2x16x8xf32>
    %23 = vector.extract_strided_slice %11 {offsets = [0, 0, 72], sizes = [2, 16, 8], strides = [1, 1, 1]} : vector<2x16x96xf32> to vector<2x16x8xf32>
    %24 = vector.extract_strided_slice %11 {offsets = [0, 0, 80], sizes = [2, 16, 8], strides = [1, 1, 1]} : vector<2x16x96xf32> to vector<2x16x8xf32>
    %25 = vector.extract_strided_slice %11 {offsets = [0, 0, 88], sizes = [2, 16, 8], strides = [1, 1, 1]} : vector<2x16x96xf32> to vector<2x16x8xf32>
    %26 = tpu.concatenate %22, %23, %24, %25 in 0 : vector<2x16x8xf32>, vector<2x16x8xf32>, vector<2x16x8xf32>, vector<2x16x8xf32> -> vector<8x16x8xf32>
    %cst_8 = arith.constant dense<0.000000e+00> : vector<8x16x16xf32>
    %27 = tpu.matmul %16, %21, %cst_8 {dimension_numbers = #tpu.dot_dimension_numbers<[2], [2], [1], [1], [0, 0, 0, 1, 1, 1], [0], [0]>} : vector<8x16x8xf32>, vector<8x16x8xf32>, vector<8x16x16xf32> -> vector<8x16x16xf32>
    %cst_9 = arith.constant dense<0xFF800000> : vector<8x16xf32>
    %28 = vector.multi_reduction <maximumf>, %27, %cst_9 [2] : vector<8x16x16xf32> to vector<8x16xf32>
    %29 = vector.shape_cast %28 : vector<8x16xf32> to vector<8x16x1xf32>
    %30 = vector.broadcast %29 : vector<8x16x1xf32> to vector<8x16x16xf32>
    %31 = arith.subf %27, %30 : vector<8x16x16xf32>
    %32 = math.exp %31 : vector<8x16x16xf32>
    %cst_10 = arith.constant dense<0.000000e+00> : vector<8x16xf32>
    %33 = vector.multi_reduction <add>, %32, %cst_10 [2] : vector<8x16x16xf32> to vector<8x16xf32>
    %34 = vector.shape_cast %33 : vector<8x16xf32> to vector<8x16x1xf32>
    %35 = tpu.reciprocal %34 {approx = true} : vector<8x16x1xf32> -> vector<8x16x1xf32>
    %36 = vector.broadcast %35 : vector<8x16x1xf32> to vector<8x16x16xf32>
    %37 = arith.mulf %32, %36 : vector<8x16x16xf32>
    %cst_11 = arith.constant dense<0.000000e+00> : vector<8x16x8xf32>
    %38 = tpu.matmul %37, %26, %cst_11 {dimension_numbers = #tpu.dot_dimension_numbers<[2], [1], [1], [2], [0, 0, 0, 1, 1, 2], [0], [0]>} : vector<8x16x16xf32>, vector<8x16x8xf32>, vector<8x16x8xf32> -> vector<8x16x8xf32>
    %39 = vector.shape_cast %38 : vector<8x16x8xf32> to vector<4x32x8xf32>
    %40 = vector.extract_strided_slice %39 {offsets = [0, 0, 0], sizes = [1, 32, 8], strides = [1, 1, 1]} : vector<4x32x8xf32> to vector<1x32x8xf32>
    %41 = vector.shape_cast %40 : vector<1x32x8xf32> to vector<32x8xf32>
    %42 = vector.extract_strided_slice %39 {offsets = [1, 0, 0], sizes = [1, 32, 8], strides = [1, 1, 1]} : vector<4x32x8xf32> to vector<1x32x8xf32>
    %43 = vector.shape_cast %42 : vector<1x32x8xf32> to vector<32x8xf32>
    %44 = vector.extract_strided_slice %39 {offsets = [2, 0, 0], sizes = [1, 32, 8], strides = [1, 1, 1]} : vector<4x32x8xf32> to vector<1x32x8xf32>
    %45 = vector.shape_cast %44 : vector<1x32x8xf32> to vector<32x8xf32>
    %46 = vector.extract_strided_slice %39 {offsets = [3, 0, 0], sizes = [1, 32, 8], strides = [1, 1, 1]} : vector<4x32x8xf32> to vector<1x32x8xf32>
    %47 = vector.shape_cast %46 : vector<1x32x8xf32> to vector<32x8xf32>
    %48 = tpu.concatenate %41, %43, %45, %47 in 1 : vector<32x8xf32>, vector<32x8xf32>, vector<32x8xf32>, vector<32x8xf32> -> vector<32x32xf32>
    %c0_12 = arith.constant 0 : index
    %c0_13 = arith.constant 0 : index
    %49 = vector.load %arg5[%c0_12, %c0_13] : memref<32x32xf32, #tpu.memory_space<vmem>>, vector<32x32xf32>
    %cst_14 = arith.constant dense<0.000000e+00> : vector<32x32xf32>
    %50 = tpu.matmul %48, %49, %cst_14 {dimension_numbers = #tpu.dot_dimension_numbers<[1], [0], [0], [1], [0, 0, 1, 1], [], []>} : vector<32x32xf32>, vector<32x32xf32>, vector<32x32xf32> -> vector<32x32xf32>
    %51 = vector.extract_strided_slice %50 {offsets = [0, 0], sizes = [8, 32], strides = [1, 1]} : vector<32x32xf32> to vector<8x32xf32>
    %52 = vector.extract_strided_slice %50 {offsets = [8, 0], sizes = [8, 32], strides = [1, 1]} : vector<32x32xf32> to vector<8x32xf32>
    %53 = vector.extract_strided_slice %50 {offsets = [16, 0], sizes = [8, 32], strides = [1, 1]} : vector<32x32xf32> to vector<8x32xf32>
    %54 = vector.extract_strided_slice %50 {offsets = [24, 0], sizes = [8, 32], strides = [1, 1]} : vector<32x32xf32> to vector<8x32xf32>
    %55 = tpu.concatenate %51, %52, %53, %54 in 1 : vector<8x32xf32>, vector<8x32xf32>, vector<8x32xf32>, vector<8x32xf32> -> vector<8x128xf32>
    %c0_15 = arith.constant 0 : index
    %c0_16 = arith.constant 0 : index
    %56 = vector.load %arg6[%c0_15, %c0_16] : memref<8x128xf32, #tpu.memory_space<vmem>>, vector<8x128xf32>
    tpu.vector_store %arg6[%c0_15, %c0_16], %55 {strides = array<i32>} : memref<8x128xf32, #tpu.memory_space<vmem>>, vector<8x128xf32>,
    return
  }
  func.func @transform_0(%arg0: i32) -> (i32, i32) {
    %c0_i32 = arith.constant 0 : i32
    %c0_i32_0 = arith.constant 0 : i32
    return %arg0, %c0_i32 : i32, i32
  }
  func.func @transform_1(%arg0: i32) -> (i32, i32) {
    %c0_i32 = arith.constant 0 : i32
    %c0_i32_0 = arith.constant 0 : i32
    %c0_i32_1 = arith.constant 0 : i32
    return %c0_i32, %c0_i32_0 : i32, i32
  }
  func.func @transform_2(%arg0: i32) -> (i32, i32) {
    %c0_i32 = arith.constant 0 : i32
    %c0_i32_0 = arith.constant 0 : i32
    %c0_i32_1 = arith.constant 0 : i32
    return %c0_i32, %c0_i32_0 : i32, i32
  }
  func.func @transform_3(%arg0: i32) -> (i32, i32) {
    %c0_i32 = arith.constant 0 : i32
    %c0_i32_0 = arith.constant 0 : i32
    %c0_i32_1 = arith.constant 0 : i32
    return %c0_i32, %c0_i32_0 : i32, i32
  }
  func.func @transform_4(%arg0: i32) -> (i32, i32) {
    %c0_i32 = arith.constant 0 : i32
    %c0_i32_0 = arith.constant 0 : i32
    %c0_i32_1 = arith.constant 0 : i32
    return %c0_i32, %c0_i32_0 : i32, i32
  }
  func.func @transform_5(%arg0: i32) -> (i32, i32) {
    %c0_i32 = arith.constant 0 : i32
    %c0_i32_0 = arith.constant 0 : i32
    return %arg0, %c0_i32 : i32, i32
  }
}

</mosaic_0001>

<llo_original>
// kernel: image_encoder.1
$region0: #{image_encoder.1}
  #allocation0 [shape = 'u32[]', space=smem, size = 0x4, offset = 0x4, fixed_abs, tag = 'smem constant byte address 0x4 - core index']
  #allocation1 [shape = 'u32[144,128]{1,0:T(1,128)}', space=vmem, size = 0x12000, scoped, tag = 'internal scratch']
  %s0 = inlined_call_operand.vmem [shape: f32[32,128], index: 0, kind: input, shape index: {}]
  %s1 = inlined_call_operand.vmem [shape: f32[128,32], index: 1, kind: input, shape index: {}]
  %s2 = inlined_call_operand.vmem [shape: f32[16,32], index: 2, kind: input, shape index: {}]
  %s3 = inlined_call_operand.vmem [shape: f32[32,96], index: 3, kind: input, shape index: {}]
  %s4 = inlined_call_operand.vmem [shape: f32[32,32], index: 4, kind: input, shape index: {}]
  %s5 = inlined_call_operand.vmem [shape: f32[8,128], index: 5, kind: output, shape index: {}]
  %s6 = sld [smem:[#allocation0]]
  $region30: #{image_encoder.1} parent=0
    _
  %s8 = ssub.s32 1, %s6
  %s9 = scalar_select 0, %s8, %s6
  // Predicated region
  $region2: #{image_encoder.1} parent=0 // pred_check
    _
  $region3: #{image_encoder.1} parent=0 // pred_check_branch
    %11 = sbr.rel (0) target = $region5
  $region4: #{image_encoder.1} parent=0 // pred_region
    _
  $region5: #{image_encoder.1} parent=0 // pred_fallthru
    _
  // Predicated region
  $region6: #{image_encoder.1} parent=0 // pred_check
    _
  $region7: #{image_encoder.1} parent=0 // pred_check_branch
    %13 = sbr.rel (0) target = $region9
  $region8: #{image_encoder.1} parent=0 // pred_region
    _
  $region9: #{image_encoder.1} parent=0 // pred_fallthru
    _
  // Predicated region
  $region10: #{image_encoder.1} parent=0 // pred_check
    _
  $region11: #{image_encoder.1} parent=0 // pred_check_branch
    %15 = sbr.rel (0) target = $region13
  $region12: #{image_encoder.1} parent=0 // pred_region
    _
  $region13: #{image_encoder.1} parent=0 // pred_fallthru
    _
  // Predicated region
  $region14: #{image_encoder.1} parent=0 // pred_check
    _
  $region15: #{image_encoder.1} parent=0 // pred_check_branch
    %17 = sbr.rel (0) target = $region17
  $region16: #{image_encoder.1} parent=0 // pred_region
    _
  $region17: #{image_encoder.1} parent=0 // pred_fallthru
    _
  // Predicated region
  $region18: #{image_encoder.1} parent=0 // pred_check
    _
  $region19: #{image_encoder.1} parent=0 // pred_check_branch
    %19 = sbr.rel (0) target = $region21
  $region20: #{image_encoder.1} parent=0 // pred_region
    _
  $region21: #{image_encoder.1} parent=0 // pred_fallthru
    _
  %v20 = vld [vmem:[%s0] sm:$0xff]
  %v21 = vld [vmem:[%s0 + $0x8] sm:$0xff]
  %v22 = vld [vmem:[%s0 + $0x10] sm:$0xff]
  %v23 = vld [vmem:[%s0 + $0x18] sm:$0xff]
  %v24 = vld [vmem:[%s1] sm:$0xff]
  %v25 = vld [vmem:[%s1 + $0x8] sm:$0xff]
  %v26 = vld [vmem:[%s1 + $0x10] sm:$0xff]
  %v27 = vld [vmem:[%s1 + $0x18] sm:$0xff]
  %v28 = vld [vmem:[%s1 + $0x20] sm:$0xff]
  %v29 = vld [vmem:[%s1 + $0x28] sm:$0xff]
  %v30 = vld [vmem:[%s1 + $0x30] sm:$0xff]
  %v31 = vld [vmem:[%s1 + $0x38] sm:$0xff]
  %v32 = vld [vmem:[%s1 + $0x40] sm:$0xff]
  %v33 = vld [vmem:[%s1 + $0x48] sm:$0xff]
  %v34 = vld [vmem:[%s1 + $0x50] sm:$0xff]
  %v35 = vld [vmem:[%s1 + $0x58] sm:$0xff]
  %v36 = vld [vmem:[%s1 + $0x60] sm:$0xff]
  %v37 = vld [vmem:[%s1 + $0x68] sm:$0xff]
  %v38 = vld [vmem:[%s1 + $0x70] sm:$0xff]
  %v39 = vld [vmem:[%s1 + $0x78] sm:$0xff]
  %40 = vmatprep.subr.mxu0 0.0
  %41 = vmatpush1.msra.mxu0 %v24
  %42 = vmatprep.subr.mxu0 0.0
  %43 = vmatpush1.msra.mxu0 %v25
  %44 = vmatprep.subr.mxu0 0.0
  %45 = vmatpush1.msra.mxu0 %v26
  %46 = vmatprep.subr.mxu0 0.0
  %47 = vmatpush1.msra.mxu0 %v27
  %48 = vmatprep.subr.mxu0 0.0
  %49 = vmatpush1.msra.mxu0 %v28
  %50 = vmatprep.subr.mxu0 0.0
  %51 = vmatpush1.msra.mxu0 %v29
  %52 = vmatprep.subr.mxu0 0.0
  %53 = vmatpush1.msra.mxu0 %v30
  %54 = vmatprep.subr.mxu0 0.0
  %55 = vmatpush1.msra.mxu0 %v31
  %56 = vmatprep.subr.mxu0 0.0
  %57 = vmatpush1.msra.mxu0 %v32
  %58 = vmatprep.subr.mxu0 0.0
  %59 = vmatpush1.msra.mxu0 %v33
  %60 = vmatprep.subr.mxu0 0.0
  %61 = vmatpush1.msra.mxu0 %v34
  %62 = vmatprep.subr.mxu0 0.0
  %63 = vmatpush1.msra.mxu0 %v35
  %64 = vmatprep.subr.mxu0 0.0
  %65 = vmatpush1.msra.mxu0 %v36
  %66 = vmatprep.subr.mxu0 0.0
  %67 = vmatpush1.msra.mxu0 %v37
  %68 = vmatprep.subr.mxu0 0.0
  %69 = vmatpush1.msra.mxu0 %v38
  %70 = vmatprep.subr.mxu0 0.0
  %71 = vmatpush1.msra.mxu0 %v39
  %72 = vmatprep.subr.mxu0 0.0
  %73 = vmatpush1.msra.mxu0 0.0
  %74 = vmatprep.subr.mxu0 0.0
  %75 = vmatpush1.msra.mxu0 0.0
  %76 = vmatprep.subr.mxu0 0.0
  %77 = vmatpush1.msra.mxu0 0.0
  %78 = vmatprep.subr.mxu0 0.0
  %79 = vmatpush1.msra.mxu0 0.0
  %80 = vmatprep.subr.mxu0 0.0
  %81 = vmatpush1.msra.mxu0 0.0
  %82 = vmatprep.subr.mxu0 0.0
  %83 = vmatpush1.msra.mxu0 0.0
  %84 = vmatprep.subr.mxu0 0.0
  %85 = vmatpush1.msra.mxu0 0.0
  %86 = vmatprep.subr.mxu0 0.0
  %87 = vmatpush1.msra.mxu0 0.0
  %88 = vmatprep.subr.mxu0 0.0
  %89 = vmatpush1.msra.mxu0 0.0
  %90 = vmatprep.subr.mxu0 0.0
  %91 = vmatpush1.msra.mxu0 0.0
  %92 = vmatprep.subr.mxu0 0.0
  %93 = vmatpush1.msra.mxu0 0.0
  %94 = vmatprep.subr.mxu0 0.0
  %95 = vmatpush1.msra.mxu0 0.0
  %96 = vmatprep.subr.mxu0 0.0
  %97 = vmatpush1.msra.mxu0 0.0
  %98 = vmatprep.subr.mxu0 0.0
  %99 = vmatpush1.msra.mxu0 0.0
  %100 = vmatprep.subr.mxu0 0.0
  %101 = vmatpush1.msra.mxu0 0.0
  %102 = vmatprep.subr.mxu0 0.0
  %103 = vmatpush1.msra.mxu0 0.0
  %104 = vmatprep.mubr.f32.mxu0 0.0
  %105 = vmatmul.mubr.f32.gmra.mrb[0].mxu0 %v20
  %v106 = vpop.f32.mrb[0].mxu0
  %v107 = vadd.f32 0.0, %v106
  %v108 = vpop.f32.mrb[0].mxu0
  %109 = vmatprep.mubr.f32.mxu0 0.0
  %110 = vmatmul.mubr.f32.gmra.mrb[0].mxu0 %v21
  %v111 = vpop.f32.mrb[0].mxu0
  %v112 = vadd.f32 0.0, %v111
  %v113 = vpop.f32.mrb[0].mxu0
  %114 = vmatprep.mubr.f32.mxu0 0.0
  %115 = vmatmul.mubr.f32.gmra.mrb[0].mxu0 %v22
  %v116 = vpop.f32.mrb[0].mxu0
  %v117 = vadd.f32 0.0, %v116
  %v118 = vpop.f32.mrb[0].mxu0
  %119 = vmatprep.mubr.f32.mxu0 0.0
  %120 = vmatmul.mubr.f32.gmra.mrb[0].mxu0 %v23
  %v121 = vpop.f32.mrb[0].mxu0
  %v122 = vadd.f32 0.0, %v121
  %v123 = vpop.f32.mrb[0].mxu0
  %124 = vdwg.mxu0
  %v125 = vld [vmem:[%s2] sm:$0xff]
  %v126 = vld [vmem:[%s2 + $0x8] sm:$0xff]
  %v127 = vadd.f32 %v107, %v125
  %v128 = vadd.f32 %v112, %v126
  %v129 = vadd.f32 %v117, %v125
  %v130 = vadd.f32 %v122, %v126
  %v131 = vld [vmem:[%s3] sm:$0xff]
  %v132 = vld [vmem:[%s3 + $0x8] sm:$0xff]
  %v133 = vld [vmem:[%s3 + $0x10] sm:$0xff]
  %v134 = vld [vmem:[%s3 + $0x18] sm:$0xff]
  %vm135 = vcmask 261120
  %v137 = vsel %vm135, %v127, 0
  %v140 = vsel %vm135, %v128, 0
  %v143 = vsel %vm135, %v129, 0
  %v146 = vsel %vm135, %v130, 0
  %148 = vmatprep.subr.mxu0 0.0
  %149 = vmatpush1.msra.mxu0 %v131
  %150 = vmatprep.subr.mxu0 0.0
  %151 = vmatpush1.msra.mxu0 %v132
  %152 = vmatprep.subr.mxu0 0.0
  %153 = vmatpush1.msra.mxu0 %v133
  %154 = vmatprep.subr.mxu0 0.0
  %155 = vmatpush1.msra.mxu0 %v134
  %156 = vmatprep.subr.mxu0 0.0
  %157 = vmatpush1.msra.mxu0 0.0
  %158 = vmatprep.subr.mxu0 0.0
  %159 = vmatpush1.msra.mxu0 0.0
  %160 = vmatprep.subr.mxu0 0.0
  %161 = vmatpush1.msra.mxu0 0.0
  %162 = vmatprep.subr.mxu0 0.0
  %163 = vmatpush1.msra.mxu0 0.0
  %164 = vmatprep.subr.mxu0 0.0
  %165 = vmatpush1.msra.mxu0 0.0
  %166 = vmatprep.subr.mxu0 0.0
  %167 = vmatpush1.msra.mxu0 0.0
  %168 = vmatprep.subr.mxu0 0.0
  %169 = vmatpush1.msra.mxu0 0.0
  %170 = vmatprep.subr.mxu0 0.0
  %171 = vmatpush1.msra.mxu0 0.0
  %172 = vmatprep.subr.mxu0 0.0
  %173 = vmatpush1.msra.mxu0 0.0
  %174 = vmatprep.subr.mxu0 0.0
  %175 = vmatpush1.msra.mxu0 0.0
  %176 = vmatprep.subr.mxu0 0.0
  %177 = vmatpush1.msra.mxu0 0.0
  %178 = vmatprep.subr.mxu0 0.0
  %179 = vmatpush1.msra.mxu0 0.0
  %180 = vmatprep.subr.mxu0 0.0
  %181 = vmatpush1.msra.mxu0 0.0
  %182 = vmatprep.subr.mxu0 0.0
  %183 = vmatpush1.msra.mxu0 0.0
  %184 = vmatprep.subr.mxu0 0.0
  %185 = vmatpush1.msra.mxu0 0.0
  %186 = vmatprep.subr.mxu0 0.0
  %187 = vmatpush1.msra.mxu0 0.0
  %188 = vmatprep.subr.mxu0 0.0
  %189 = vmatpush1.msra.mxu0 0.0
  %190 = vmatprep.subr.mxu0 0.0
  %191 = vmatpush1.msra.mxu0 0.0
  %192 = vmatprep.subr.mxu0 0.0
  %193 = vmatpush1.msra.mxu0 0.0
  %194 = vmatprep.subr.mxu0 0.0
  %195 = vmatpush1.msra.mxu0 0.0
  %196 = vmatprep.subr.mxu0 0.0
  %197 = vmatpush1.msra.mxu0 0.0
  %198 = vmatprep.subr.mxu0 0.0
  %199 = vmatpush1.msra.mxu0 0.0
  %200 = vmatprep.subr.mxu0 0.0
  %201 = vmatpush1.msra.mxu0 0.0
  %202 = vmatprep.subr.mxu0 0.0
  %203 = vmatpush1.msra.mxu0 0.0
  %204 = vmatprep.subr.mxu0 0.0
  %205 = vmatpush1.msra.mxu0 0.0
  %206 = vmatprep.subr.mxu0 0.0
  %207 = vmatpush1.msra.mxu0 0.0
  %208 = vmatprep.subr.mxu0 0.0
  %209 = vmatpush1.msra.mxu0 0.0
  %210 = vmatprep.subr.mxu0 0.0
  %211 = vmatpush1.msra.mxu0 0.0
  %212 = vmatprep.mubr.f32.mxu0 0.0
  %213 = vmatmul.mubr.f32.gmra.mrb[0].mxu0 %v137
  %v214 = vpop.f32.mrb[0].mxu0
  %v215 = vadd.f32 0.0, %v214
  %v216 = vpop.f32.mrb[0].mxu0
  %217 = vmatprep.mubr.f32.mxu0 0.0
  %218 = vmatmul.mubr.f32.gmra.mrb[0].mxu0 %v140
  %v219 = vpop.f32.mrb[0].mxu0
  %v220 = vadd.f32 0.0, %v219
  %v221 = vpop.f32.mrb[0].mxu0
  %222 = vmatprep.mubr.f32.mxu0 0.0
  %223 = vmatmul.mubr.f32.gmra.mrb[0].mxu0 %v143
  %v224 = vpop.f32.mrb[0].mxu0
  %v225 = vadd.f32 0.0, %v224
  %v226 = vpop.f32.mrb[0].mxu0
  %227 = vmatprep.mubr.f32.mxu0 0.0
  %228 = vmatmul.mubr.f32.gmra.mrb[0].mxu0 %v146
  %v229 = vpop.f32.mrb[0].mxu0
  %v230 = vadd.f32 0.0, %v229
  %v231 = vpop.f32.mrb[0].mxu0
  %232 = vdwg.mxu0
  %237 = vrot.lane.b32.xlu0 %v215, 120
  %v238 = vpop.permute.xlu0 %237
  %239 = vrot.lane.b32.xlu0 %v220, 120
  %v240 = vpop.permute.xlu0 %239
  %241 = vrot.lane.b32.xlu0 %v225, 120
  %v242 = vpop.permute.xlu0 %241
  %243 = vrot.lane.b32.xlu0 %v230, 120
  %v244 = vpop.permute.xlu0 %243
  %245 = vrot.lane.b32.xlu0 %v215, 112
  %v246 = vpop.permute.xlu0 %245
  %247 = vrot.lane.b32.xlu0 %v220, 112
  %v248 = vpop.permute.xlu0 %247
  %249 = vrot.lane.b32.xlu0 %v225, 112
  %v250 = vpop.permute.xlu0 %249
  %251 = vrot.lane.b32.xlu0 %v230, 112
  %v252 = vpop.permute.xlu0 %251
  %253 = vrot.lane.b32.xlu0 %v215, 104
  %v254 = vpop.permute.xlu0 %253
  %255 = vrot.lane.b32.xlu0 %v220, 104
  %v256 = vpop.permute.xlu0 %255
  %257 = vrot.lane.b32.xlu0 %v225, 104
  %v258 = vpop.permute.xlu0 %257
  %259 = vrot.lane.b32.xlu0 %v230, 104
  %v260 = vpop.permute.xlu0 %259
  %261 = vrot.lane.b32.xlu0 %v215, 96
  %v262 = vpop.permute.xlu0 %261
  %263 = vrot.lane.b32.xlu0 %v220, 96
  %v264 = vpop.permute.xlu0 %263
  %vm265 = vcmask 64512
  %v266 = vsel %vm265, %v215, 0
  %v268 = vsel %vm265, %v220, 0
  %v270 = vsel %vm265, %v262, 0
  %v272 = vsel %vm265, %v264, 0
  %274 = vmatprep.subr.mxu0 0.0
  %275 = vmatpush1.xpose.msra.mxu0 %v270
  %276 = vmatprep.subr.mxu0 0.0
  %277 = vmatpush1.xpose.msra.mxu0 %v272
  %278 = vmatprep.subr.mxu0 0.0
  %279 = vmatpush1.xpose.msra.mxu0 0.0
  %280 = vmatprep.subr.mxu0 0.0
  %281 = vmatpush1.xpose.msra.mxu0 0.0
  %282 = vmatprep.subr.mxu0 0.0
  %283 = vmatpush1.xpose.msra.mxu0 0.0
  %284 = vmatprep.subr.mxu0 0.0
  %285 = vmatpush1.xpose.msra.mxu0 0.0
  %286 = vmatprep.subr.mxu0 0.0
  %287 = vmatpush1.xpose.msra.mxu0 0.0
  %288 = vmatprep.subr.mxu0 0.0
  %289 = vmatpush1.xpose.msra.mxu0 0.0
  %290 = vmatprep.subr.mxu0 0.0
  %291 = vmatpush1.xpose.msra.mxu0 0.0
  %292 = vmatprep.subr.mxu0 0.0
  %293 = vmatpush1.xpose.msra.mxu0 0.0
  %294 = vmatprep.subr.mxu0 0.0
  %295 = vmatpush1.xpose.msra.mxu0 0.0
  %296 = vmatprep.subr.mxu0 0.0
  %297 = vmatpush1.xpose.msra.mxu0 0.0
  %298 = vmatprep.subr.mxu0 0.0
  %299 = vmatpush1.xpose.msra.mxu0 0.0
  %300 = vmatprep.subr.mxu0 0.0
  %301 = vmatpush1.xpose.msra.mxu0 0.0
  %302 = vmatprep.subr.mxu0 0.0
  %303 = vmatpush1.xpose.msra.mxu0 0.0
  %304 = vmatprep.subr.mxu0 0.0
  %305 = vmatpush1.xpose.msra.mxu0 0.0
  %306 = vmatprep.subr.mxu0 0.0
  %307 = vmatpush1.xpose.msra.mxu0 0.0
  %308 = vmatprep.subr.mxu0 0.0
  %309 = vmatpush1.xpose.msra.mxu0 0.0
  %310 = vmatprep.subr.mxu0 0.0
  %311 = vmatpush1.xpose.msra.mxu0 0.0
  %312 = vmatprep.subr.mxu0 0.0
  %313 = vmatpush1.xpose.msra.mxu0 0.0
  %314 = vmatprep.subr.mxu0 0.0
  %315 = vmatpush1.xpose.msra.mxu0 0.0
  %316 = vmatprep.subr.mxu0 0.0
  %317 = vmatpush1.xpose.msra.mxu0 0.0
  %318 = vmatprep.subr.mxu0 0.0
  %319 = vmatpush1.xpose.msra.mxu0 0.0
  %320 = vmatprep.subr.mxu0 0.0
  %321 = vmatpush1.xpose.msra.mxu0 0.0
  %322 = vmatprep.subr.mxu0 0.0
  %323 = vmatpush1.xpose.msra.mxu0 0.0
  %324 = vmatprep.subr.mxu0 0.0
  %325 = vmatpush1.xpose.msra.mxu0 0.0
  %326 = vmatprep.subr.mxu0 0.0
  %327 = vmatpush1.xpose.msra.mxu0 0.0
  %328 = vmatprep.subr.mxu0 0.0
  %329 = vmatpush1.xpose.msra.mxu0 0.0
  %330 = vmatprep.subr.mxu0 0.0
  %331 = vmatpush1.xpose.msra.mxu0 0.0
  %332 = vmatprep.subr.mxu0 0.0
  %333 = vmatpush1.xpose.msra.mxu0 0.0
  %334 = vmatprep.subr.mxu0 0.0
  %335 = vmatpush1.xpose.msra.mxu0 0.0
  %336 = vmatprep.subr.mxu0 0.0
  %337 = vmatpush1.xpose.msra.mxu0 0.0
  %338 = vmatprep.mubr.f32.mxu0 0.0
  %339 = vmatmul.mubr.f32.gmra.mrb[0].mxu0 %v266
  %v340 = vpop.f32.mrb[0].mxu0
  %v341 = vadd.f32 0.0, %v340
  %v342 = vpop.f32.mrb[0].mxu0
  %343 = vmatprep.mubr.f32.mxu0 0.0
  %344 = vmatmul.mubr.f32.gmra.mrb[0].mxu0 %v268
  %v345 = vpop.f32.mrb[0].mxu0
  %v346 = vadd.f32 0.0, %v345
  %v347 = vpop.f32.mrb[0].mxu0
  %348 = vdwg.mxu0
  %349 = vrot.lane.b32.xlu0 %v225, 96
  %v350 = vpop.permute.xlu0 %349
  %351 = vrot.lane.b32.xlu0 %v230, 96
  %v352 = vpop.permute.xlu0 %351
  %v353 = vsel %vm265, %v225, 0
  %v355 = vsel %vm265, %v230, 0
  %v357 = vsel %vm265, %v350, 0
  %v359 = vsel %vm265, %v352, 0
  %361 = vmatprep.subr.mxu0 0.0
  %362 = vmatpush1.xpose.msra.mxu0 %v357
  %363 = vmatprep.subr.mxu0 0.0
  %364 = vmatpush1.xpose.msra.mxu0 %v359
  %365 = vmatprep.subr.mxu0 0.0
  %366 = vmatpush1.xpose.msra.mxu0 0.0
  %367 = vmatprep.subr.mxu0 0.0
  %368 = vmatpush1.xpose.msra.mxu0 0.0
  %369 = vmatprep.subr.mxu0 0.0
  %370 = vmatpush1.xpose.msra.mxu0 0.0
  %371 = vmatprep.subr.mxu0 0.0
  %372 = vmatpush1.xpose.msra.mxu0 0.0
  %373 = vmatprep.subr.mxu0 0.0
  %374 = vmatpush1.xpose.msra.mxu0 0.0
  %375 = vmatprep.subr.mxu0 0.0
  %376 = vmatpush1.xpose.msra.mxu0 0.0
  %377 = vmatprep.subr.mxu0 0.0
  %378 = vmatpush1.xpose.msra.mxu0 0.0
  %379 = vmatprep.subr.mxu0 0.0
  %380 = vmatpush1.xpose.msra.mxu0 0.0
  %381 = vmatprep.subr.mxu0 0.0
  %382 = vmatpush1.xpose.msra.mxu0 0.0
  %383 = vmatprep.subr.mxu0 0.0
  %384 = vmatpush1.xpose.msra.mxu0 0.0
  %385 = vmatprep.subr.mxu0 0.0
  %386 = vmatpush1.xpose.msra.mxu0 0.0
  %387 = vmatprep.subr.mxu0 0.0
  %388 = vmatpush1.xpose.msra.mxu0 0.0
  %389 = vmatprep.subr.mxu0 0.0
  %390 = vmatpush1.xpose.msra.mxu0 0.0
  %391 = vmatprep.subr.mxu0 0.0
  %392 = vmatpush1.xpose.msra.mxu0 0.0
  %393 = vmatprep.subr.mxu0 0.0
  %394 = vmatpush1.xpose.msra.mxu0 0.0
  %395 = vmatprep.subr.mxu0 0.0
  %396 = vmatpush1.xpose.msra.mxu0 0.0
  %397 = vmatprep.subr.mxu0 0.0
  %398 = vmatpush1.xpose.msra.mxu0 0.0
  %399 = vmatprep.subr.mxu0 0.0
  %400 = vmatpush1.xpose.msra.mxu0 0.0
  %401 = vmatprep.subr.mxu0 0.0
  %402 = vmatpush1.xpose.msra.mxu0 0.0
  %403 = vmatprep.subr.mxu0 0.0
  %404 = vmatpush1.xpose.msra.mxu0 0.0
  %405 = vmatprep.subr.mxu0 0.0
  %406 = vmatpush1.xpose.msra.mxu0 0.0
  %407 = vmatprep.subr.mxu0 0.0
  %408 = vmatpush1.xpose.msra.mxu0 0.0
  %409 = vmatprep.subr.mxu0 0.0
  %410 = vmatpush1.xpose.msra.mxu0 0.0
  %411 = vmatprep.subr.mxu0 0.0
  %412 = vmatpush1.xpose.msra.mxu0 0.0
  %413 = vmatprep.subr.mxu0 0.0
  %414 = vmatpush1.xpose.msra.mxu0 0.0
  %415 = vmatprep.subr.mxu0 0.0
  %416 = vmatpush1.xpose.msra.mxu0 0.0
  %417 = vmatprep.subr.mxu0 0.0
  %418 = vmatpush1.xpose.msra.mxu0 0.0
  %419 = vmatprep.subr.mxu0 0.0
  %420 = vmatpush1.xpose.msra.mxu0 0.0
  %421 = vmatprep.subr.mxu0 0.0
  %422 = vmatpush1.xpose.msra.mxu0 0.0
  %423 = vmatprep.subr.mxu0 0.0
  %424 = vmatpush1.xpose.msra.mxu0 0.0
  %425 = vmatprep.mubr.f32.mxu0 0.0
  %426 = vmatmul.mubr.f32.gmra.mrb[0].mxu0 %v353
  %v427 = vpop.f32.mrb[0].mxu0
  %v428 = vadd.f32 0.0, %v427
  %v429 = vpop.f32.mrb[0].mxu0
  %430 = vmatprep.mubr.f32.mxu0 0.0
  %431 = vmatmul.mubr.f32.gmra.mrb[0].mxu0 %v355
  %v432 = vpop.f32.mrb[0].mxu0
  %v433 = vadd.f32 0.0, %v432
  %v434 = vpop.f32.mrb[0].mxu0
  %435 = vdwg.mxu0
  %436 = vrot.lane.b32.xlu0 %v238, 96
  %v437 = vpop.permute.xlu0 %436
  %438 = vrot.lane.b32.xlu0 %v240, 96
  %v439 = vpop.permute.xlu0 %438
  %v440 = vsel %vm265, %v238, 0
  %v442 = vsel %vm265, %v240, 0
  %v444 = vsel %vm265, %v437, 0
  %v446 = vsel %vm265, %v439, 0
  %448 = vmatprep.subr.mxu0 0.0
  %449 = vmatpush1.xpose.msra.mxu0 %v444
  %450 = vmatprep.subr.mxu0 0.0
  %451 = vmatpush1.xpose.msra.mxu0 %v446
  %452 = vmatprep.subr.mxu0 0.0
  %453 = vmatpush1.xpose.msra.mxu0 0.0
  %454 = vmatprep.subr.mxu0 0.0
  %455 = vmatpush1.xpose.msra.mxu0 0.0
  %456 = vmatprep.subr.mxu0 0.0
  %457 = vmatpush1.xpose.msra.mxu0 0.0
  %458 = vmatprep.subr.mxu0 0.0
  %459 = vmatpush1.xpose.msra.mxu0 0.0
  %460 = vmatprep.subr.mxu0 0.0
  %461 = vmatpush1.xpose.msra.mxu0 0.0
  %462 = vmatprep.subr.mxu0 0.0
  %463 = vmatpush1.xpose.msra.mxu0 0.0
  %464 = vmatprep.subr.mxu0 0.0
  %465 = vmatpush1.xpose.msra.mxu0 0.0
  %466 = vmatprep.subr.mxu0 0.0
  %467 = vmatpush1.xpose.msra.mxu0 0.0
  %468 = vmatprep.subr.mxu0 0.0
  %469 = vmatpush1.xpose.msra.mxu0 0.0
  %470 = vmatprep.subr.mxu0 0.0
  %471 = vmatpush1.xpose.msra.mxu0 0.0
  %472 = vmatprep.subr.mxu0 0.0
  %473 = vmatpush1.xpose.msra.mxu0 0.0
  %474 = vmatprep.subr.mxu0 0.0
  %475 = vmatpush1.xpose.msra.mxu0 0.0
  %476 = vmatprep.subr.mxu0 0.0
  %477 = vmatpush1.xpose.msra.mxu0 0.0
  %478 = vmatprep.subr.mxu0 0.0
  %479 = vmatpush1.xpose.msra.mxu0 0.0
  %480 = vmatprep.subr.mxu0 0.0
  %481 = vmatpush1.xpose.msra.mxu0 0.0
  %482 = vmatprep.subr.mxu0 0.0
  %483 = vmatpush1.xpose.msra.mxu0 0.0
  %484 = vmatprep.subr.mxu0 0.0
  %485 = vmatpush1.xpose.msra.mxu0 0.0
  %486 = vmatprep.subr.mxu0 0.0
  %487 = vmatpush1.xpose.msra.mxu0 0.0
  %488 = vmatprep.subr.mxu0 0.0
  %489 = vmatpush1.xpose.msra.mxu0 0.0
  %490 = vmatprep.subr.mxu0 0.0
  %491 = vmatpush1.xpose.msra.mxu0 0.0
  %492 = vmatprep.subr.mxu0 0.0
  %493 = vmatpush1.xpose.msra.mxu0 0.0
  %494 = vmatprep.subr.mxu0 0.0
  %495 = vmatpush1.xpose.msra.mxu0 0.0
  %496 = vmatprep.subr.mxu0 0.0
  %497 = vmatpush1.xpose.msra.mxu0 0.0
  %498 = vmatprep.subr.mxu0 0.0
  %499 = vmatpush1.xpose.msra.mxu0 0.0
  %500 = vmatprep.subr.mxu0 0.0
  %501 = vmatpush1.xpose.msra.mxu0 0.0
  %502 = vmatprep.subr.mxu0 0.0
  %503 = vmatpush1.xpose.msra.mxu0 0.0
  %504 = vmatprep.subr.mxu0 0.0
  %505 = vmatpush1.xpose.msra.mxu0 0.0
  %506 = vmatprep.subr.mxu0 0.0
  %507 = vmatpush1.xpose.msra.mxu0 0.0
  %508 = vmatprep.subr.mxu0 0.0
  %509 = vmatpush1.xpose.msra.mxu0 0.0
  %510 = vmatprep.subr.mxu0 0.0
  %511 = vmatpush1.xpose.msra.mxu0 0.0
  %512 = vmatprep.mubr.f32.mxu0 0.0
  %513 = vmatmul.mubr.f32.gmra.mrb[0].mxu0 %v440
  %v514 = vpop.f32.mrb[0].mxu0
  %v515 = vadd.f32 0.0, %v514
  %v516 = vpop.f32.mrb[0].mxu0
  %517 = vmatprep.mubr.f32.mxu0 0.0
  %518 = vmatmul.mubr.f32.gmra.mrb[0].mxu0 %v442
  %v519 = vpop.f32.mrb[0].mxu0
  %v520 = vadd.f32 0.0, %v519
  %v521 = vpop.f32.mrb[0].mxu0
  %522 = vdwg.mxu0
  %523 = vrot.lane.b32.xlu0 %v242, 96
  %v524 = vpop.permute.xlu0 %523
  %525 = vrot.lane.b32.xlu0 %v244, 96
  %v526 = vpop.permute.xlu0 %525
  %v527 = vsel %vm265, %v242, 0
  %v529 = vsel %vm265, %v244, 0
  %v531 = vsel %vm265, %v524, 0
  %v533 = vsel %vm265, %v526, 0
  %535 = vmatprep.subr.mxu0 0.0
  %536 = vmatpush1.xpose.msra.mxu0 %v531
  %537 = vmatprep.subr.mxu0 0.0
  %538 = vmatpush1.xpose.msra.mxu0 %v533
  %539 = vmatprep.subr.mxu0 0.0
  %540 = vmatpush1.xpose.msra.mxu0 0.0
  %541 = vmatprep.subr.mxu0 0.0
  %542 = vmatpush1.xpose.msra.mxu0 0.0
  %543 = vmatprep.subr.mxu0 0.0
  %544 = vmatpush1.xpose.msra.mxu0 0.0
  %545 = vmatprep.subr.mxu0 0.0
  %546 = vmatpush1.xpose.msra.mxu0 0.0
  %547 = vmatprep.subr.mxu0 0.0
  %548 = vmatpush1.xpose.msra.mxu0 0.0
  %549 = vmatprep.subr.mxu0 0.0
  %550 = vmatpush1.xpose.msra.mxu0 0.0
  %551 = vmatprep.subr.mxu0 0.0
  %552 = vmatpush1.xpose.msra.mxu0 0.0
  %553 = vmatprep.subr.mxu0 0.0
  %554 = vmatpush1.xpose.msra.mxu0 0.0
  %555 = vmatprep.subr.mxu0 0.0
  %556 = vmatpush1.xpose.msra.mxu0 0.0
  %557 = vmatprep.subr.mxu0 0.0
  %558 = vmatpush1.xpose.msra.mxu0 0.0
  %559 = vmatprep.subr.mxu0 0.0
  %560 = vmatpush1.xpose.msra.mxu0 0.0
  %561 = vmatprep.subr.mxu0 0.0
  %562 = vmatpush1.xpose.msra.mxu0 0.0
  %563 = vmatprep.subr.mxu0 0.0
  %564 = vmatpush1.xpose.msra.mxu0 0.0
  %565 = vmatprep.subr.mxu0 0.0
  %566 = vmatpush1.xpose.msra.mxu0 0.0
  %567 = vmatprep.subr.mxu0 0.0
  %568 = vmatpush1.xpose.msra.mxu0 0.0
  %569 = vmatprep.subr.mxu0 0.0
  %570 = vmatpush1.xpose.msra.mxu0 0.0
  %571 = vmatprep.subr.mxu0 0.0
  %572 = vmatpush1.xpose.msra.mxu0 0.0
  %573 = vmatprep.subr.mxu0 0.0
  %574 = vmatpush1.xpose.msra.mxu0 0.0
  %575 = vmatprep.subr.mxu0 0.0
  %576 = vmatpush1.xpose.msra.mxu0 0.0
  %577 = vmatprep.subr.mxu0 0.0
  %578 = vmatpush1.xpose.msra.mxu0 0.0
  %579 = vmatprep.subr.mxu0 0.0
  %580 = vmatpush1.xpose.msra.mxu0 0.0
  %581 = vmatprep.subr.mxu0 0.0
  %582 = vmatpush1.xpose.msra.mxu0 0.0
  %583 = vmatprep.subr.mxu0 0.0
  %584 = vmatpush1.xpose.msra.mxu0 0.0
  %585 = vmatprep.subr.mxu0 0.0
  %586 = vmatpush1.xpose.msra.mxu0 0.0
  %587 = vmatprep.subr.mxu0 0.0
  %588 = vmatpush1.xpose.msra.mxu0 0.0
  %589 = vmatprep.subr.mxu0 0.0
  %590 = vmatpush1.xpose.msra.mxu0 0.0
  %591 = vmatprep.subr.mxu0 0.0
  %592 = vmatpush1.xpose.msra.mxu0 0.0
  %593 = vmatprep.subr.mxu0 0.0
  %594 = vmatpush1.xpose.msra.mxu0 0.0
  %595 = vmatprep.subr.mxu0 0.0
  %596 = vmatpush1.xpose.msra.mxu0 0.0
  %597 = vmatprep.subr.mxu0 0.0
  %598 = vmatpush1.xpose.msra.mxu0 0.0
  %599 = vmatprep.mubr.f32.mxu0 0.0
  %600 = vmatmul.mubr.f32.gmra.mrb[0].mxu0 %v527
  %v601 = vpop.f32.mrb[0].mxu0
  %v602 = vadd.f32 0.0, %v601
  %v603 = vpop.f32.mrb[0].mxu0
  %604 = vmatprep.mubr.f32.mxu0 0.0
  %605 = vmatmul.mubr.f32.gmra.mrb[0].mxu0 %v529
  %v606 = vpop.f32.mrb[0].mxu0
  %v607 = vadd.f32 0.0, %v606
  %v608 = vpop.f32.mrb[0].mxu0
  %609 = vdwg.mxu0
  %610 = vrot.lane.b32.xlu0 %v246, 96
  %v611 = vpop.permute.xlu0 %610
  %612 = vrot.lane.b32.xlu0 %v248, 96
  %v613 = vpop.permute.xlu0 %612
  %v614 = vsel %vm265, %v246, 0
  %v616 = vsel %vm265, %v248, 0
  %v618 = vsel %vm265, %v611, 0
  %v620 = vsel %vm265, %v613, 0
  %622 = vmatprep.subr.mxu0 0.0
  %623 = vmatpush1.xpose.msra.mxu0 %v618
  %624 = vmatprep.subr.mxu0 0.0
  %625 = vmatpush1.xpose.msra.mxu0 %v620
  %626 = vmatprep.subr.mxu0 0.0
  %627 = vmatpush1.xpose.msra.mxu0 0.0
  %628 = vmatprep.subr.mxu0 0.0
  %629 = vmatpush1.xpose.msra.mxu0 0.0
  %630 = vmatprep.subr.mxu0 0.0
  %631 = vmatpush1.xpose.msra.mxu0 0.0
  %632 = vmatprep.subr.mxu0 0.0
  %633 = vmatpush1.xpose.msra.mxu0 0.0
  %634 = vmatprep.subr.mxu0 0.0
  %635 = vmatpush1.xpose.msra.mxu0 0.0
  %636 = vmatprep.subr.mxu0 0.0
  %637 = vmatpush1.xpose.msra.mxu0 0.0
  %638 = vmatprep.subr.mxu0 0.0
  %639 = vmatpush1.xpose.msra.mxu0 0.0
  %640 = vmatprep.subr.mxu0 0.0
  %641 = vmatpush1.xpose.msra.mxu0 0.0
  %642 = vmatprep.subr.mxu0 0.0
  %643 = vmatpush1.xpose.msra.mxu0 0.0
  %644 = vmatprep.subr.mxu0 0.0
  %645 = vmatpush1.xpose.msra.mxu0 0.0
  %646 = vmatprep.subr.mxu0 0.0
  %647 = vmatpush1.xpose.msra.mxu0 0.0
  %648 = vmatprep.subr.mxu0 0.0
  %649 = vmatpush1.xpose.msra.mxu0 0.0
  %650 = vmatprep.subr.mxu0 0.0
  %651 = vmatpush1.xpose.msra.mxu0 0.0
  %652 = vmatprep.subr.mxu0 0.0
  %653 = vmatpush1.xpose.msra.mxu0 0.0
  %654 = vmatprep.subr.mxu0 0.0
  %655 = vmatpush1.xpose.msra.mxu0 0.0
  %656 = vmatprep.subr.mxu0 0.0
  %657 = vmatpush1.xpose.msra.mxu0 0.0
  %658 = vmatprep.subr.mxu0 0.0
  %659 = vmatpush1.xpose.msra.mxu0 0.0
  %660 = vmatprep.subr.mxu0 0.0
  %661 = vmatpush1.xpose.msra.mxu0 0.0
  %662 = vmatprep.subr.mxu0 0.0
  %663 = vmatpush1.xpose.msra.mxu0 0.0
  %664 = vmatprep.subr.mxu0 0.0
  %665 = vmatpush1.xpose.msra.mxu0 0.0
  %666 = vmatprep.subr.mxu0 0.0
  %667 = vmatpush1.xpose.msra.mxu0 0.0
  %668 = vmatprep.subr.mxu0 0.0
  %669 = vmatpush1.xpose.msra.mxu0 0.0
  %670 = vmatprep.subr.mxu0 0.0
  %671 = vmatpush1.xpose.msra.mxu0 0.0
  %672 = vmatprep.subr.mxu0 0.0
  %673 = vmatpush1.xpose.msra.mxu0 0.0
  %674 = vmatprep.subr.mxu0 0.0
  %675 = vmatpush1.xpose.msra.mxu0 0.0
  %676 = vmatprep.subr.mxu0 0.0
  %677 = vmatpush1.xpose.msra.mxu0 0.0
  %678 = vmatprep.subr.mxu0 0.0
  %679 = vmatpush1.xpose.msra.mxu0 0.0
  %680 = vmatprep.subr.mxu0 0.0
  %681 = vmatpush1.xpose.msra.mxu0 0.0
  %682 = vmatprep.subr.mxu0 0.0
  %683 = vmatpush1.xpose.msra.mxu0 0.0
  %684 = vmatprep.subr.mxu0 0.0
  %685 = vmatpush1.xpose.msra.mxu0 0.0
  %686 = vmatprep.mubr.f32.mxu0 0.0
  %687 = vmatmul.mubr.f32.gmra.mrb[0].mxu0 %v614
  %v688 = vpop.f32.mrb[0].mxu0
  %v689 = vadd.f32 0.0, %v688
  %v690 = vpop.f32.mrb[0].mxu0
  %691 = vmatprep.mubr.f32.mxu0 0.0
  %692 = vmatmul.mubr.f32.gmra.mrb[0].mxu0 %v616
  %v693 = vpop.f32.mrb[0].mxu0
  %v694 = vadd.f32 0.0, %v693
  %v695 = vpop.f32.mrb[0].mxu0
  %696 = vdwg.mxu0
  %697 = vrot.lane.b32.xlu0 %v250, 96
  %v698 = vpop.permute.xlu0 %697
  %699 = vrot.lane.b32.xlu0 %v252, 96
  %v700 = vpop.permute.xlu0 %699
  %v701 = vsel %vm265, %v250, 0
  %v703 = vsel %vm265, %v252, 0
  %v705 = vsel %vm265, %v698, 0
  %v707 = vsel %vm265, %v700, 0
  %709 = vmatprep.subr.mxu0 0.0
  %710 = vmatpush1.xpose.msra.mxu0 %v705
  %711 = vmatprep.subr.mxu0 0.0
  %712 = vmatpush1.xpose.msra.mxu0 %v707
  %713 = vmatprep.subr.mxu0 0.0
  %714 = vmatpush1.xpose.msra.mxu0 0.0
  %715 = vmatprep.subr.mxu0 0.0
  %716 = vmatpush1.xpose.msra.mxu0 0.0
  %717 = vmatprep.subr.mxu0 0.0
  %718 = vmatpush1.xpose.msra.mxu0 0.0
  %719 = vmatprep.subr.mxu0 0.0
  %720 = vmatpush1.xpose.msra.mxu0 0.0
  %721 = vmatprep.subr.mxu0 0.0
  %722 = vmatpush1.xpose.msra.mxu0 0.0
  %723 = vmatprep.subr.mxu0 0.0
  %724 = vmatpush1.xpose.msra.mxu0 0.0
  %725 = vmatprep.subr.mxu0 0.0
  %726 = vmatpush1.xpose.msra.mxu0 0.0
  %727 = vmatprep.subr.mxu0 0.0
  %728 = vmatpush1.xpose.msra.mxu0 0.0
  %729 = vmatprep.subr.mxu0 0.0
  %730 = vmatpush1.xpose.msra.mxu0 0.0
  %731 = vmatprep.subr.mxu0 0.0
  %732 = vmatpush1.xpose.msra.mxu0 0.0
  %733 = vmatprep.subr.mxu0 0.0
  %734 = vmatpush1.xpose.msra.mxu0 0.0
  %735 = vmatprep.subr.mxu0 0.0
  %736 = vmatpush1.xpose.msra.mxu0 0.0
  %737 = vmatprep.subr.mxu0 0.0
  %738 = vmatpush1.xpose.msra.mxu0 0.0
  %739 = vmatprep.subr.mxu0 0.0
  %740 = vmatpush1.xpose.msra.mxu0 0.0
  %741 = vmatprep.subr.mxu0 0.0
  %742 = vmatpush1.xpose.msra.mxu0 0.0
  %743 = vmatprep.subr.mxu0 0.0
  %744 = vmatpush1.xpose.msra.mxu0 0.0
  %745 = vmatprep.subr.mxu0 0.0
  %746 = vmatpush1.xpose.msra.mxu0 0.0
  %747 = vmatprep.subr.mxu0 0.0
  %748 = vmatpush1.xpose.msra.mxu0 0.0
  %749 = vmatprep.subr.mxu0 0.0
  %750 = vmatpush1.xpose.msra.mxu0 0.0
  %751 = vmatprep.subr.mxu0 0.0
  %752 = vmatpush1.xpose.msra.mxu0 0.0
  %753 = vmatprep.subr.mxu0 0.0
  %754 = vmatpush1.xpose.msra.mxu0 0.0
  %755 = vmatprep.subr.mxu0 0.0
  %756 = vmatpush1.xpose.msra.mxu0 0.0
  %757 = vmatprep.subr.mxu0 0.0
  %758 = vmatpush1.xpose.msra.mxu0 0.0
  %759 = vmatprep.subr.mxu0 0.0
  %760 = vmatpush1.xpose.msra.mxu0 0.0
  %761 = vmatprep.subr.mxu0 0.0
  %762 = vmatpush1.xpose.msra.mxu0 0.0
  %763 = vmatprep.subr.mxu0 0.0
  %764 = vmatpush1.xpose.msra.mxu0 0.0
  %765 = vmatprep.subr.mxu0 0.0
  %766 = vmatpush1.xpose.msra.mxu0 0.0
  %767 = vmatprep.subr.mxu0 0.0
  %768 = vmatpush1.xpose.msra.mxu0 0.0
  %769 = vmatprep.subr.mxu0 0.0
  %770 = vmatpush1.xpose.msra.mxu0 0.0
  %771 = vmatprep.subr.mxu0 0.0
  %772 = vmatpush1.xpose.msra.mxu0 0.0
  %773 = vmatprep.mubr.f32.mxu0 0.0
  %774 = vmatmul.mubr.f32.gmra.mrb[0].mxu0 %v701
  %v775 = vpop.f32.mrb[0].mxu0
  %v776 = vadd.f32 0.0, %v775
  %v777 = vpop.f32.mrb[0].mxu0
  %778 = vmatprep.mubr.f32.mxu0 0.0
  %779 = vmatmul.mubr.f32.gmra.mrb[0].mxu0 %v703
  %v780 = vpop.f32.mrb[0].mxu0
  %v781 = vadd.f32 0.0, %v780
  %v782 = vpop.f32.mrb[0].mxu0
  %783 = vdwg.mxu0
  %784 = vrot.lane.b32.xlu0 %v254, 96
  %v785 = vpop.permute.xlu0 %784
  %786 = vrot.lane.b32.xlu0 %v256, 96
  %v787 = vpop.permute.xlu0 %786
  %v788 = vsel %vm265, %v254, 0
  %v790 = vsel %vm265, %v256, 0
  %v792 = vsel %vm265, %v785, 0
  %v794 = vsel %vm265, %v787, 0
  %796 = vmatprep.subr.mxu0 0.0
  %797 = vmatpush1.xpose.msra.mxu0 %v792
  %798 = vmatprep.subr.mxu0 0.0
  %799 = vmatpush1.xpose.msra.mxu0 %v794
  %800 = vmatprep.subr.mxu0 0.0
  %801 = vmatpush1.xpose.msra.mxu0 0.0
  %802 = vmatprep.subr.mxu0 0.0
  %803 = vmatpush1.xpose.msra.mxu0 0.0
  %804 = vmatprep.subr.mxu0 0.0
  %805 = vmatpush1.xpose.msra.mxu0 0.0
  %806 = vmatprep.subr.mxu0 0.0
  %807 = vmatpush1.xpose.msra.mxu0 0.0
  %808 = vmatprep.subr.mxu0 0.0
  %809 = vmatpush1.xpose.msra.mxu0 0.0
  %810 = vmatprep.subr.mxu0 0.0
  %811 = vmatpush1.xpose.msra.mxu0 0.0
  %812 = vmatprep.subr.mxu0 0.0
  %813 = vmatpush1.xpose.msra.mxu0 0.0
  %814 = vmatprep.subr.mxu0 0.0
  %815 = vmatpush1.xpose.msra.mxu0 0.0
  %816 = vmatprep.subr.mxu0 0.0
  %817 = vmatpush1.xpose.msra.mxu0 0.0
  %818 = vmatprep.subr.mxu0 0.0
  %819 = vmatpush1.xpose.msra.mxu0 0.0
  %820 = vmatprep.subr.mxu0 0.0
  %821 = vmatpush1.xpose.msra.mxu0 0.0
  %822 = vmatprep.subr.mxu0 0.0
  %823 = vmatpush1.xpose.msra.mxu0 0.0
  %824 = vmatprep.subr.mxu0 0.0
  %825 = vmatpush1.xpose.msra.mxu0 0.0
  %826 = vmatprep.subr.mxu0 0.0
  %827 = vmatpush1.xpose.msra.mxu0 0.0
  %828 = vmatprep.subr.mxu0 0.0
  %829 = vmatpush1.xpose.msra.mxu0 0.0
  %830 = vmatprep.subr.mxu0 0.0
  %831 = vmatpush1.xpose.msra.mxu0 0.0
  %832 = vmatprep.subr.mxu0 0.0
  %833 = vmatpush1.xpose.msra.mxu0 0.0
  %834 = vmatprep.subr.mxu0 0.0
  %835 = vmatpush1.xpose.msra.mxu0 0.0
  %836 = vmatprep.subr.mxu0 0.0
  %837 = vmatpush1.xpose.msra.mxu0 0.0
  %838 = vmatprep.subr.mxu0 0.0
  %839 = vmatpush1.xpose.msra.mxu0 0.0
  %840 = vmatprep.subr.mxu0 0.0
  %841 = vmatpush1.xpose.msra.mxu0 0.0
  %842 = vmatprep.subr.mxu0 0.0
  %843 = vmatpush1.xpose.msra.mxu0 0.0
  %844 = vmatprep.subr.mxu0 0.0
  %845 = vmatpush1.xpose.msra.mxu0 0.0
  %846 = vmatprep.subr.mxu0 0.0
  %847 = vmatpush1.xpose.msra.mxu0 0.0
  %848 = vmatprep.subr.mxu0 0.0
  %849 = vmatpush1.xpose.msra.mxu0 0.0
  %850 = vmatprep.subr.mxu0 0.0
  %851 = vmatpush1.xpose.msra.mxu0 0.0
  %852 = vmatprep.subr.mxu0 0.0
  %853 = vmatpush1.xpose.msra.mxu0 0.0
  %854 = vmatprep.subr.mxu0 0.0
  %855 = vmatpush1.xpose.msra.mxu0 0.0
  %856 = vmatprep.subr.mxu0 0.0
  %857 = vmatpush1.xpose.msra.mxu0 0.0
  %858 = vmatprep.subr.mxu0 0.0
  %859 = vmatpush1.xpose.msra.mxu0 0.0
  %860 = vmatprep.mubr.f32.mxu0 0.0
  %861 = vmatmul.mubr.f32.gmra.mrb[0].mxu0 %v788
  %v862 = vpop.f32.mrb[0].mxu0
  %v863 = vadd.f32 0.0, %v862
  %v864 = vpop.f32.mrb[0].mxu0
  %865 = vmatprep.mubr.f32.mxu0 0.0
  %866 = vmatmul.mubr.f32.gmra.mrb[0].mxu0 %v790
  %v867 = vpop.f32.mrb[0].mxu0
  %v868 = vadd.f32 0.0, %v867
  %v869 = vpop.f32.mrb[0].mxu0
  %870 = vdwg.mxu0
  %871 = vrot.lane.b32.xlu0 %v258, 96
  %v872 = vpop.permute.xlu0 %871
  %873 = vrot.lane.b32.xlu0 %v260, 96
  %v874 = vpop.permute.xlu0 %873
  %v875 = vsel %vm265, %v258, 0
  %v877 = vsel %vm265, %v260, 0
  %v879 = vsel %vm265, %v872, 0
  %v881 = vsel %vm265, %v874, 0
  %883 = vmatprep.subr.mxu0 0.0
  %884 = vmatpush1.xpose.msra.mxu0 %v879
  %885 = vmatprep.subr.mxu0 0.0
  %886 = vmatpush1.xpose.msra.mxu0 %v881
  %887 = vmatprep.subr.mxu0 0.0
  %888 = vmatpush1.xpose.msra.mxu0 0.0
  %889 = vmatprep.subr.mxu0 0.0
  %890 = vmatpush1.xpose.msra.mxu0 0.0
  %891 = vmatprep.subr.mxu0 0.0
  %892 = vmatpush1.xpose.msra.mxu0 0.0
  %893 = vmatprep.subr.mxu0 0.0
  %894 = vmatpush1.xpose.msra.mxu0 0.0
  %895 = vmatprep.subr.mxu0 0.0
  %896 = vmatpush1.xpose.msra.mxu0 0.0
  %897 = vmatprep.subr.mxu0 0.0
  %898 = vmatpush1.xpose.msra.mxu0 0.0
  %899 = vmatprep.subr.mxu0 0.0
  %900 = vmatpush1.xpose.msra.mxu0 0.0
  %901 = vmatprep.subr.mxu0 0.0
  %902 = vmatpush1.xpose.msra.mxu0 0.0
  %903 = vmatprep.subr.mxu0 0.0
  %904 = vmatpush1.xpose.msra.mxu0 0.0
  %905 = vmatprep.subr.mxu0 0.0
  %906 = vmatpush1.xpose.msra.mxu0 0.0
  %907 = vmatprep.subr.mxu0 0.0
  %908 = vmatpush1.xpose.msra.mxu0 0.0
  %909 = vmatprep.subr.mxu0 0.0
  %910 = vmatpush1.xpose.msra.mxu0 0.0
  %911 = vmatprep.subr.mxu0 0.0
  %912 = vmatpush1.xpose.msra.mxu0 0.0
  %913 = vmatprep.subr.mxu0 0.0
  %914 = vmatpush1.xpose.msra.mxu0 0.0
  %915 = vmatprep.subr.mxu0 0.0
  %916 = vmatpush1.xpose.msra.mxu0 0.0
  %917 = vmatprep.subr.mxu0 0.0
  %918 = vmatpush1.xpose.msra.mxu0 0.0
  %919 = vmatprep.subr.mxu0 0.0
  %920 = vmatpush1.xpose.msra.mxu0 0.0
  %921 = vmatprep.subr.mxu0 0.0
  %922 = vmatpush1.xpose.msra.mxu0 0.0
  %923 = vmatprep.subr.mxu0 0.0
  %924 = vmatpush1.xpose.msra.mxu0 0.0
  %925 = vmatprep.subr.mxu0 0.0
  %926 = vmatpush1.xpose.msra.mxu0 0.0
  %927 = vmatprep.subr.mxu0 0.0
  %928 = vmatpush1.xpose.msra.mxu0 0.0
  %929 = vmatprep.subr.mxu0 0.0
  %930 = vmatpush1.xpose.msra.mxu0 0.0
  %931 = vmatprep.subr.mxu0 0.0
  %932 = vmatpush1.xpose.msra.mxu0 0.0
  %933 = vmatprep.subr.mxu0 0.0
  %934 = vmatpush1.xpose.msra.mxu0 0.0
  %935 = vmatprep.subr.mxu0 0.0
  %936 = vmatpush1.xpose.msra.mxu0 0.0
  %937 = vmatprep.subr.mxu0 0.0
  %938 = vmatpush1.xpose.msra.mxu0 0.0
  %939 = vmatprep.subr.mxu0 0.0
  %940 = vmatpush1.xpose.msra.mxu0 0.0
  %941 = vmatprep.subr.mxu0 0.0
  %942 = vmatpush1.xpose.msra.mxu0 0.0
  %943 = vmatprep.subr.mxu0 0.0
  %944 = vmatpush1.xpose.msra.mxu0 0.0
  %945 = vmatprep.subr.mxu0 0.0
  %946 = vmatpush1.xpose.msra.mxu0 0.0
  %947 = vmatprep.mubr.f32.mxu0 0.0
  %948 = vmatmul.mubr.f32.gmra.mrb[0].mxu0 %v875
  %v949 = vpop.f32.mrb[0].mxu0
  %v950 = vadd.f32 0.0, %v949
  %v951 = vpop.f32.mrb[0].mxu0
  %952 = vmatprep.mubr.f32.mxu0 0.0
  %953 = vmatmul.mubr.f32.gmra.mrb[0].mxu0 %v877
  %v954 = vpop.f32.mrb[0].mxu0
  %v955 = vadd.f32 0.0, %v954
  %v956 = vpop.f32.mrb[0].mxu0
  %957 = vdwg.mxu0
  %vm958 = vcmask 130048
  %v959 = vsel %vm958, %v341, -inf
  %960 = vmax.xlane.f32.xlu0 %v959
  %v961 = vpop.xlane.xlu0 %960
  %v962 = vsel %vm958, %v346, -inf
  %963 = vmax.xlane.f32.xlu0 %v962
  %v964 = vpop.xlane.xlu0 %963
  %v965 = vsel %vm958, %v428, -inf
  %966 = vmax.xlane.f32.xlu0 %v965
  %v967 = vpop.xlane.xlu0 %966
  %v968 = vsel %vm958, %v433, -inf
  %969 = vmax.xlane.f32.xlu0 %v968
  %v970 = vpop.xlane.xlu0 %969
  %v971 = vsel %vm958, %v515, -inf
  %972 = vmax.xlane.f32.xlu0 %v971
  %v973 = vpop.xlane.xlu0 %972
  %v974 = vsel %vm958, %v520, -inf
  %975 = vmax.xlane.f32.xlu0 %v974
  %v976 = vpop.xlane.xlu0 %975
  %v977 = vsel %vm958, %v602, -inf
  %978 = vmax.xlane.f32.xlu0 %v977
  %v979 = vpop.xlane.xlu0 %978
  %v980 = vsel %vm958, %v607, -inf
  %981 = vmax.xlane.f32.xlu0 %v980
  %v982 = vpop.xlane.xlu0 %981
  %v983 = vsel %vm958, %v689, -inf
  %984 = vmax.xlane.f32.xlu0 %v983
  %v985 = vpop.xlane.xlu0 %984
  %v986 = vsel %vm958, %v694, -inf
  %987 = vmax.xlane.f32.xlu0 %v986
  %v988 = vpop.xlane.xlu0 %987
  %v989 = vsel %vm958, %v776, -inf
  %990 = vmax.xlane.f32.xlu0 %v989
  %v991 = vpop.xlane.xlu0 %990
  %v992 = vsel %vm958, %v781, -inf
  %993 = vmax.xlane.f32.xlu0 %v992
  %v994 = vpop.xlane.xlu0 %993
  %v995 = vsel %vm958, %v863, -inf
  %996 = vmax.xlane.f32.xlu0 %v995
  %v997 = vpop.xlane.xlu0 %996
  %v998 = vsel %vm958, %v868, -inf
  %999 = vmax.xlane.f32.xlu0 %v998
  %v1000 = vpop.xlane.xlu0 %999
  %v1001 = vsel %vm958, %v950, -inf
  %1002 = vmax.xlane.f32.xlu0 %v1001
  %v1003 = vpop.xlane.xlu0 %1002
  %v1004 = vsel %vm958, %v955, -inf
  %1005 = vmax.xlane.f32.xlu0 %v1004
  %v1006 = vpop.xlane.xlu0 %1005
  %v1007 = vsub.f32 %v341, %v961
  %v1008 = vsub.f32 %v346, %v964
  %v1009 = vsub.f32 %v428, %v967
  %v1010 = vsub.f32 %v433, %v970
  %v1011 = vsub.f32 %v515, %v973
  %v1012 = vsub.f32 %v520, %v976
  %v1013 = vsub.f32 %v602, %v979
  %v1014 = vsub.f32 %v607, %v982
  %v1015 = vsub.f32 %v689, %v985
  %v1016 = vsub.f32 %v694, %v988
  %v1017 = vsub.f32 %v776, %v991
  %v1018 = vsub.f32 %v781, %v994
  %v1019 = vsub.f32 %v863, %v997
  %v1020 = vsub.f32 %v868, %v1000
  %v1021 = vsub.f32 %v950, %v1003
  %v1022 = vsub.f32 %v955, %v1006
  %v1023 = vmul.f32 %v1007, 1.442695
  %v1024 = vpow.pop %v1023
  %v1025 = vmul.f32 %v1008, 1.442695
  %v1026 = vpow.pop %v1025
  %v1027 = vmul.f32 %v1009, 1.442695
  %v1028 = vpow.pop %v1027
  %v1029 = vmul.f32 %v1010, 1.442695
  %v1030 = vpow.pop %v1029
  %v1031 = vmul.f32 %v1011, 1.442695
  %v1032 = vpow.pop %v1031
  %v1033 = vmul.f32 %v1012, 1.442695
  %v1034 = vpow.pop %v1033
  %v1035 = vmul.f32 %v1013, 1.442695
  %v1036 = vpow.pop %v1035
  %v1037 = vmul.f32 %v1014, 1.442695
  %v1038 = vpow.pop %v1037
  %v1039 = vmul.f32 %v1015, 1.442695
  %v1040 = vpow.pop %v1039
  %v1041 = vmul.f32 %v1016, 1.442695
  %v1042 = vpow.pop %v1041
  %v1043 = vmul.f32 %v1017, 1.442695
  %v1044 = vpow.pop %v1043
  %v1045 = vmul.f32 %v1018, 1.442695
  %v1046 = vpow.pop %v1045
  %v1047 = vmul.f32 %v1019, 1.442695
  %v1048 = vpow.pop %v1047
  %v1049 = vmul.f32 %v1020, 1.442695
  %v1050 = vpow.pop %v1049
  %v1051 = vmul.f32 %v1021, 1.442695
  %v1052 = vpow.pop %v1051
  %v1053 = vmul.f32 %v1022, 1.442695
  %v1054 = vpow.pop %v1053
  %v1055 = vsel %vm958, %v1024, 0.0
  %1056 = vadd.xlane.f32.xlu0 %v1055
  %v1057 = vpop.xlane.xlu0 %1056
  %v1058 = vsel %vm958, %v1026, 0.0
  %1059 = vadd.xlane.f32.xlu0 %v1058
  %v1060 = vpop.xlane.xlu0 %1059
  %v1061 = vsel %vm958, %v1028, 0.0
  %1062 = vadd.xlane.f32.xlu0 %v1061
  %v1063 = vpop.xlane.xlu0 %1062
  %v1064 = vsel %vm958, %v1030, 0.0
  %1065 = vadd.xlane.f32.xlu0 %v1064
  %v1066 = vpop.xlane.xlu0 %1065
  %v1067 = vsel %vm958, %v1032, 0.0
  %1068 = vadd.xlane.f32.xlu0 %v1067
  %v1069 = vpop.xlane.xlu0 %1068
  %v1070 = vsel %vm958, %v1034, 0.0
  %1071 = vadd.xlane.f32.xlu0 %v1070
  %v1072 = vpop.xlane.xlu0 %1071
  %v1073 = vsel %vm958, %v1036, 0.0
  %1074 = vadd.xlane.f32.xlu0 %v1073
  %v1075 = vpop.xlane.xlu0 %1074
  %v1076 = vsel %vm958, %v1038, 0.0
  %1077 = vadd.xlane.f32.xlu0 %v1076
  %v1078 = vpop.xlane.xlu0 %1077
  %v1079 = vsel %vm958, %v1040, 0.0
  %1080 = vadd.xlane.f32.xlu0 %v1079
  %v1081 = vpop.xlane.xlu0 %1080
  %v1082 = vsel %vm958, %v1042, 0.0
  %1083 = vadd.xlane.f32.xlu0 %v1082
  %v1084 = vpop.xlane.xlu0 %1083
  %v1085 = vsel %vm958, %v1044, 0.0
  %1086 = vadd.xlane.f32.xlu0 %v1085
  %v1087 = vpop.xlane.xlu0 %1086
  %v1088 = vsel %vm958, %v1046, 0.0
  %1089 = vadd.xlane.f32.xlu0 %v1088
  %v1090 = vpop.xlane.xlu0 %1089
  %v1091 = vsel %vm958, %v1048, 0.0
  %1092 = vadd.xlane.f32.xlu0 %v1091
  %v1093 = vpop.xlane.xlu0 %1092
  %v1094 = vsel %vm958, %v1050, 0.0
  %1095 = vadd.xlane.f32.xlu0 %v1094
  %v1096 = vpop.xlane.xlu0 %1095
  %v1097 = vsel %vm958, %v1052, 0.0
  %1098 = vadd.xlane.f32.xlu0 %v1097
  %v1099 = vpop.xlane.xlu0 %1098
  %v1100 = vsel %vm958, %v1054, 0.0
  %1101 = vadd.xlane.f32.xlu0 %v1100
  %v1102 = vpop.xlane.xlu0 %1101
  %v1103 = vrcp.pop %v1057
  %v1104 = vrcp.pop %v1060
  %v1105 = vrcp.pop %v1063
  %v1106 = vrcp.pop %v1066
  %v1107 = vrcp.pop %v1069
  %v1108 = vrcp.pop %v1072
  %v1109 = vrcp.pop %v1075
  %v1110 = vrcp.pop %v1078
  %v1111 = vrcp.pop %v1081
  %v1112 = vrcp.pop %v1084
  %v1113 = vrcp.pop %v1087
  %v1114 = vrcp.pop %v1090
  %v1115 = vrcp.pop %v1093
  %v1116 = vrcp.pop %v1096
  %v1117 = vrcp.pop %v1099
  %v1118 = vrcp.pop %v1102
  %v1119 = vmul.f32 %v1024, %v1103
  %v1120 = vmul.f32 %v1026, %v1104
  %v1121 = vmul.f32 %v1028, %v1105
  %v1122 = vmul.f32 %v1030, %v1106
  %v1123 = vmul.f32 %v1032, %v1107
  %v1124 = vmul.f32 %v1034, %v1108
  %v1125 = vmul.f32 %v1036, %v1109
  %v1126 = vmul.f32 %v1038, %v1110
  %v1127 = vmul.f32 %v1040, %v1111
  %v1128 = vmul.f32 %v1042, %v1112
  %v1129 = vmul.f32 %v1044, %v1113
  %v1130 = vmul.f32 %v1046, %v1114
  %v1131 = vmul.f32 %v1048, %v1115
  %v1132 = vmul.f32 %v1050, %v1116
  %v1133 = vmul.f32 %v1052, %v1117
  %v1134 = vmul.f32 %v1054, %v1118
  %1135 = vrot.lane.b32.xlu0 %v215, 64
  %v1136 = vpop.permute.xlu0 %1135
  %1137 = vrot.lane.b32.xlu0 %v220, 64
  %v1138 = vpop.permute.xlu0 %1137
  %v1142 = vsel %vm958, %v1119, 0
  %v1145 = vsel %vm958, %v1120, 0
  %1147 = vmatprep.subr.mxu0 0.0
  %1148 = vmatpush1.msra.mxu0 %v1136
  %1149 = vmatprep.subr.mxu0 0.0
  %1150 = vmatpush1.msra.mxu0 %v1138
  %1151 = vmatprep.subr.mxu0 0.0
  %1152 = vmatpush1.msra.mxu0 0.0
  %1153 = vmatprep.subr.mxu0 0.0
  %1154 = vmatpush1.msra.mxu0 0.0
  %1155 = vmatprep.subr.mxu0 0.0
  %1156 = vmatpush1.msra.mxu0 0.0
  %1157 = vmatprep.subr.mxu0 0.0
  %1158 = vmatpush1.msra.mxu0 0.0
  %1159 = vmatprep.subr.mxu0 0.0
  %1160 = vmatpush1.msra.mxu0 0.0
  %1161 = vmatprep.subr.mxu0 0.0
  %1162 = vmatpush1.msra.mxu0 0.0
  %1163 = vmatprep.subr.mxu0 0.0
  %1164 = vmatpush1.msra.mxu0 0.0
  %1165 = vmatprep.subr.mxu0 0.0
  %1166 = vmatpush1.msra.mxu0 0.0
  %1167 = vmatprep.subr.mxu0 0.0
  %1168 = vmatpush1.msra.mxu0 0.0
  %1169 = vmatprep.subr.mxu0 0.0
  %1170 = vmatpush1.msra.mxu0 0.0
  %1171 = vmatprep.subr.mxu0 0.0
  %1172 = vmatpush1.msra.mxu0 0.0
  %1173 = vmatprep.subr.mxu0 0.0
  %1174 = vmatpush1.msra.mxu0 0.0
  %1175 = vmatprep.subr.mxu0 0.0
  %1176 = vmatpush1.msra.mxu0 0.0
  %1177 = vmatprep.subr.mxu0 0.0
  %1178 = vmatpush1.msra.mxu0 0.0
  %1179 = vmatprep.subr.mxu0 0.0
  %1180 = vmatpush1.msra.mxu0 0.0
  %1181 = vmatprep.subr.mxu0 0.0
  %1182 = vmatpush1.msra.mxu0 0.0
  %1183 = vmatprep.subr.mxu0 0.0
  %1184 = vmatpush1.msra.mxu0 0.0
  %1185 = vmatprep.subr.mxu0 0.0
  %1186 = vmatpush1.msra.mxu0 0.0
  %1187 = vmatprep.subr.mxu0 0.0
  %1188 = vmatpush1.msra.mxu0 0.0
  %1189 = vmatprep.subr.mxu0 0.0
  %1190 = vmatpush1.msra.mxu0 0.0
  %1191 = vmatprep.subr.mxu0 0.0
  %1192 = vmatpush1.msra.mxu0 0.0
  %1193 = vmatprep.subr.mxu0 0.0
  %1194 = vmatpush1.msra.mxu0 0.0
  %1195 = vmatprep.subr.mxu0 0.0
  %1196 = vmatpush1.msra.mxu0 0.0
  %1197 = vmatprep.subr.mxu0 0.0
  %1198 = vmatpush1.msra.mxu0 0.0
  %1199 = vmatprep.subr.mxu0 0.0
  %1200 = vmatpush1.msra.mxu0 0.0
  %1201 = vmatprep.subr.mxu0 0.0
  %1202 = vmatpush1.msra.mxu0 0.0
  %1203 = vmatprep.subr.mxu0 0.0
  %1204 = vmatpush1.msra.mxu0 0.0
  %1205 = vmatprep.subr.mxu0 0.0
  %1206 = vmatpush1.msra.mxu0 0.0
  %1207 = vmatprep.subr.mxu0 0.0
  %1208 = vmatpush1.msra.mxu0 0.0
  %1209 = vmatprep.subr.mxu0 0.0
  %1210 = vmatpush1.msra.mxu0 0.0
  %1211 = vmatprep.mubr.f32.mxu0 0.0
  %1212 = vmatmul.mubr.f32.gmra.mrb[0].mxu0 %v1142
  %v1213 = vpop.f32.mrb[0].mxu0
  %v1214 = vadd.f32 0.0, %v1213
  %v1215 = vpop.f32.mrb[0].mxu0
  %1216 = vmatprep.mubr.f32.mxu0 0.0
  %1217 = vmatmul.mubr.f32.gmra.mrb[0].mxu0 %v1145
  %v1218 = vpop.f32.mrb[0].mxu0
  %v1219 = vadd.f32 0.0, %v1218
  %v1220 = vpop.f32.mrb[0].mxu0
  %1221 = vdwg.mxu0
  %1222 = vrot.lane.b32.xlu0 %v225, 64
  %v1223 = vpop.permute.xlu0 %1222
  %1224 = vrot.lane.b32.xlu0 %v230, 64
  %v1225 = vpop.permute.xlu0 %1224
  %v1229 = vsel %vm958, %v1121, 0
  %v1232 = vsel %vm958, %v1122, 0
  %1234 = vmatprep.subr.mxu0 0.0
  %1235 = vmatpush1.msra.mxu0 %v1223
  %1236 = vmatprep.subr.mxu0 0.0
  %1237 = vmatpush1.msra.mxu0 %v1225
  %1238 = vmatprep.subr.mxu0 0.0
  %1239 = vmatpush1.msra.mxu0 0.0
  %1240 = vmatprep.subr.mxu0 0.0
  %1241 = vmatpush1.msra.mxu0 0.0
  %1242 = vmatprep.subr.mxu0 0.0
  %1243 = vmatpush1.msra.mxu0 0.0
  %1244 = vmatprep.subr.mxu0 0.0
  %1245 = vmatpush1.msra.mxu0 0.0
  %1246 = vmatprep.subr.mxu0 0.0
  %1247 = vmatpush1.msra.mxu0 0.0
  %1248 = vmatprep.subr.mxu0 0.0
  %1249 = vmatpush1.msra.mxu0 0.0
  %1250 = vmatprep.subr.mxu0 0.0
  %1251 = vmatpush1.msra.mxu0 0.0
  %1252 = vmatprep.subr.mxu0 0.0
  %1253 = vmatpush1.msra.mxu0 0.0
  %1254 = vmatprep.subr.mxu0 0.0
  %1255 = vmatpush1.msra.mxu0 0.0
  %1256 = vmatprep.subr.mxu0 0.0
  %1257 = vmatpush1.msra.mxu0 0.0
  %1258 = vmatprep.subr.mxu0 0.0
  %1259 = vmatpush1.msra.mxu0 0.0
  %1260 = vmatprep.subr.mxu0 0.0
  %1261 = vmatpush1.msra.mxu0 0.0
  %1262 = vmatprep.subr.mxu0 0.0
  %1263 = vmatpush1.msra.mxu0 0.0
  %1264 = vmatprep.subr.mxu0 0.0
  %1265 = vmatpush1.msra.mxu0 0.0
  %1266 = vmatprep.subr.mxu0 0.0
  %1267 = vmatpush1.msra.mxu0 0.0
  %1268 = vmatprep.subr.mxu0 0.0
  %1269 = vmatpush1.msra.mxu0 0.0
  %1270 = vmatprep.subr.mxu0 0.0
  %1271 = vmatpush1.msra.mxu0 0.0
  %1272 = vmatprep.subr.mxu0 0.0
  %1273 = vmatpush1.msra.mxu0 0.0
  %1274 = vmatprep.subr.mxu0 0.0
  %1275 = vmatpush1.msra.mxu0 0.0
  %1276 = vmatprep.subr.mxu0 0.0
  %1277 = vmatpush1.msra.mxu0 0.0
  %1278 = vmatprep.subr.mxu0 0.0
  %1279 = vmatpush1.msra.mxu0 0.0
  %1280 = vmatprep.subr.mxu0 0.0
  %1281 = vmatpush1.msra.mxu0 0.0
  %1282 = vmatprep.subr.mxu0 0.0
  %1283 = vmatpush1.msra.mxu0 0.0
  %1284 = vmatprep.subr.mxu0 0.0
  %1285 = vmatpush1.msra.mxu0 0.0
  %1286 = vmatprep.subr.mxu0 0.0
  %1287 = vmatpush1.msra.mxu0 0.0
  %1288 = vmatprep.subr.mxu0 0.0
  %1289 = vmatpush1.msra.mxu0 0.0
  %1290 = vmatprep.subr.mxu0 0.0
  %1291 = vmatpush1.msra.mxu0 0.0
  %1292 = vmatprep.subr.mxu0 0.0
  %1293 = vmatpush1.msra.mxu0 0.0
  %1294 = vmatprep.subr.mxu0 0.0
  %1295 = vmatpush1.msra.mxu0 0.0
  %1296 = vmatprep.subr.mxu0 0.0
  %1297 = vmatpush1.msra.mxu0 0.0
  %1298 = vmatprep.mubr.f32.mxu0 0.0
  %1299 = vmatmul.mubr.f32.gmra.mrb[0].mxu0 %v1229
  %v1300 = vpop.f32.mrb[0].mxu0
  %v1301 = vadd.f32 0.0, %v1300
  %v1302 = vpop.f32.mrb[0].mxu0
  %1303 = vmatprep.mubr.f32.mxu0 0.0
  %1304 = vmatmul.mubr.f32.gmra.mrb[0].mxu0 %v1232
  %v1305 = vpop.f32.mrb[0].mxu0
  %v1306 = vadd.f32 0.0, %v1305
  %v1307 = vpop.f32.mrb[0].mxu0
  %1308 = vdwg.mxu0
  %1309 = vrot.lane.b32.xlu0 %v238, 64
  %v1310 = vpop.permute.xlu0 %1309
  %1311 = vrot.lane.b32.xlu0 %v240, 64
  %v1312 = vpop.permute.xlu0 %1311
  %v1316 = vsel %vm958, %v1123, 0
  %v1319 = vsel %vm958, %v1124, 0
  %1321 = vmatprep.subr.mxu0 0.0
  %1322 = vmatpush1.msra.mxu0 %v1310
  %1323 = vmatprep.subr.mxu0 0.0
  %1324 = vmatpush1.msra.mxu0 %v1312
  %1325 = vmatprep.subr.mxu0 0.0
  %1326 = vmatpush1.msra.mxu0 0.0
  %1327 = vmatprep.subr.mxu0 0.0
  %1328 = vmatpush1.msra.mxu0 0.0
  %1329 = vmatprep.subr.mxu0 0.0
  %1330 = vmatpush1.msra.mxu0 0.0
  %1331 = vmatprep.subr.mxu0 0.0
  %1332 = vmatpush1.msra.mxu0 0.0
  %1333 = vmatprep.subr.mxu0 0.0
  %1334 = vmatpush1.msra.mxu0 0.0
  %1335 = vmatprep.subr.mxu0 0.0
  %1336 = vmatpush1.msra.mxu0 0.0
  %1337 = vmatprep.subr.mxu0 0.0
  %1338 = vmatpush1.msra.mxu0 0.0
  %1339 = vmatprep.subr.mxu0 0.0
  %1340 = vmatpush1.msra.mxu0 0.0
  %1341 = vmatprep.subr.mxu0 0.0
  %1342 = vmatpush1.msra.mxu0 0.0
  %1343 = vmatprep.subr.mxu0 0.0
  %1344 = vmatpush1.msra.mxu0 0.0
  %1345 = vmatprep.subr.mxu0 0.0
  %1346 = vmatpush1.msra.mxu0 0.0
  %1347 = vmatprep.subr.mxu0 0.0
  %1348 = vmatpush1.msra.mxu0 0.0
  %1349 = vmatprep.subr.mxu0 0.0
  %1350 = vmatpush1.msra.mxu0 0.0
  %1351 = vmatprep.subr.mxu0 0.0
  %1352 = vmatpush1.msra.mxu0 0.0
  %1353 = vmatprep.subr.mxu0 0.0
  %1354 = vmatpush1.msra.mxu0 0.0
  %1355 = vmatprep.subr.mxu0 0.0
  %1356 = vmatpush1.msra.mxu0 0.0
  %1357 = vmatprep.subr.mxu0 0.0
  %1358 = vmatpush1.msra.mxu0 0.0
  %1359 = vmatprep.subr.mxu0 0.0
  %1360 = vmatpush1.msra.mxu0 0.0
  %1361 = vmatprep.subr.mxu0 0.0
  %1362 = vmatpush1.msra.mxu0 0.0
  %1363 = vmatprep.subr.mxu0 0.0
  %1364 = vmatpush1.msra.mxu0 0.0
  %1365 = vmatprep.subr.mxu0 0.0
  %1366 = vmatpush1.msra.mxu0 0.0
  %1367 = vmatprep.subr.mxu0 0.0
  %1368 = vmatpush1.msra.mxu0 0.0
  %1369 = vmatprep.subr.mxu0 0.0
  %1370 = vmatpush1.msra.mxu0 0.0
  %1371 = vmatprep.subr.mxu0 0.0
  %1372 = vmatpush1.msra.mxu0 0.0
  %1373 = vmatprep.subr.mxu0 0.0
  %1374 = vmatpush1.msra.mxu0 0.0
  %1375 = vmatprep.subr.mxu0 0.0
  %1376 = vmatpush1.msra.mxu0 0.0
  %1377 = vmatprep.subr.mxu0 0.0
  %1378 = vmatpush1.msra.mxu0 0.0
  %1379 = vmatprep.subr.mxu0 0.0
  %1380 = vmatpush1.msra.mxu0 0.0
  %1381 = vmatprep.subr.mxu0 0.0
  %1382 = vmatpush1.msra.mxu0 0.0
  %1383 = vmatprep.subr.mxu0 0.0
  %1384 = vmatpush1.msra.mxu0 0.0
  %1385 = vmatprep.mubr.f32.mxu0 0.0
  %1386 = vmatmul.mubr.f32.gmra.mrb[0].mxu0 %v1316
  %v1387 = vpop.f32.mrb[0].mxu0
  %v1388 = vadd.f32 0.0, %v1387
  %v1389 = vpop.f32.mrb[0].mxu0
  %1390 = vmatprep.mubr.f32.mxu0 0.0
  %1391 = vmatmul.mubr.f32.gmra.mrb[0].mxu0 %v1319
  %v1392 = vpop.f32.mrb[0].mxu0
  %v1393 = vadd.f32 0.0, %v1392
  %v1394 = vpop.f32.mrb[0].mxu0
  %1395 = vdwg.mxu0
  %1396 = vrot.lane.b32.xlu0 %v242, 64
  %v1397 = vpop.permute.xlu0 %1396
  %1398 = vrot.lane.b32.xlu0 %v244, 64
  %v1399 = vpop.permute.xlu0 %1398
  %v1403 = vsel %vm958, %v1125, 0
  %v1406 = vsel %vm958, %v1126, 0
  %1408 = vmatprep.subr.mxu0 0.0
  %1409 = vmatpush1.msra.mxu0 %v1397
  %1410 = vmatprep.subr.mxu0 0.0
  %1411 = vmatpush1.msra.mxu0 %v1399
  %1412 = vmatprep.subr.mxu0 0.0
  %1413 = vmatpush1.msra.mxu0 0.0
  %1414 = vmatprep.subr.mxu0 0.0
  %1415 = vmatpush1.msra.mxu0 0.0
  %1416 = vmatprep.subr.mxu0 0.0
  %1417 = vmatpush1.msra.mxu0 0.0
  %1418 = vmatprep.subr.mxu0 0.0
  %1419 = vmatpush1.msra.mxu0 0.0
  %1420 = vmatprep.subr.mxu0 0.0
  %1421 = vmatpush1.msra.mxu0 0.0
  %1422 = vmatprep.subr.mxu0 0.0
  %1423 = vmatpush1.msra.mxu0 0.0
  %1424 = vmatprep.subr.mxu0 0.0
  %1425 = vmatpush1.msra.mxu0 0.0
  %1426 = vmatprep.subr.mxu0 0.0
  %1427 = vmatpush1.msra.mxu0 0.0
  %1428 = vmatprep.subr.mxu0 0.0
  %1429 = vmatpush1.msra.mxu0 0.0
  %1430 = vmatprep.subr.mxu0 0.0
  %1431 = vmatpush1.msra.mxu0 0.0
  %1432 = vmatprep.subr.mxu0 0.0
  %1433 = vmatpush1.msra.mxu0 0.0
  %1434 = vmatprep.subr.mxu0 0.0
  %1435 = vmatpush1.msra.mxu0 0.0
  %1436 = vmatprep.subr.mxu0 0.0
  %1437 = vmatpush1.msra.mxu0 0.0
  %1438 = vmatprep.subr.mxu0 0.0
  %1439 = vmatpush1.msra.mxu0 0.0
  %1440 = vmatprep.subr.mxu0 0.0
  %1441 = vmatpush1.msra.mxu0 0.0
  %1442 = vmatprep.subr.mxu0 0.0
  %1443 = vmatpush1.msra.mxu0 0.0
  %1444 = vmatprep.subr.mxu0 0.0
  %1445 = vmatpush1.msra.mxu0 0.0
  %1446 = vmatprep.subr.mxu0 0.0
  %1447 = vmatpush1.msra.mxu0 0.0
  %1448 = vmatprep.subr.mxu0 0.0
  %1449 = vmatpush1.msra.mxu0 0.0
  %1450 = vmatprep.subr.mxu0 0.0
  %1451 = vmatpush1.msra.mxu0 0.0
  %1452 = vmatprep.subr.mxu0 0.0
  %1453 = vmatpush1.msra.mxu0 0.0
  %1454 = vmatprep.subr.mxu0 0.0
  %1455 = vmatpush1.msra.mxu0 0.0
  %1456 = vmatprep.subr.mxu0 0.0
  %1457 = vmatpush1.msra.mxu0 0.0
  %1458 = vmatprep.subr.mxu0 0.0
  %1459 = vmatpush1.msra.mxu0 0.0
  %1460 = vmatprep.subr.mxu0 0.0
  %1461 = vmatpush1.msra.mxu0 0.0
  %1462 = vmatprep.subr.mxu0 0.0
  %1463 = vmatpush1.msra.mxu0 0.0
  %1464 = vmatprep.subr.mxu0 0.0
  %1465 = vmatpush1.msra.mxu0 0.0
  %1466 = vmatprep.subr.mxu0 0.0
  %1467 = vmatpush1.msra.mxu0 0.0
  %1468 = vmatprep.subr.mxu0 0.0
  %1469 = vmatpush1.msra.mxu0 0.0
  %1470 = vmatprep.subr.mxu0 0.0
  %1471 = vmatpush1.msra.mxu0 0.0
  %1472 = vmatprep.mubr.f32.mxu0 0.0
  %1473 = vmatmul.mubr.f32.gmra.mrb[0].mxu0 %v1403
  %v1474 = vpop.f32.mrb[0].mxu0
  %v1475 = vadd.f32 0.0, %v1474
  %v1476 = vpop.f32.mrb[0].mxu0
  %1477 = vmatprep.mubr.f32.mxu0 0.0
  %1478 = vmatmul.mubr.f32.gmra.mrb[0].mxu0 %v1406
  %v1479 = vpop.f32.mrb[0].mxu0
  %v1480 = vadd.f32 0.0, %v1479
  %v1481 = vpop.f32.mrb[0].mxu0
  %1482 = vdwg.mxu0
  %1483 = vrot.lane.b32.xlu0 %v246, 64
  %v1484 = vpop.permute.xlu0 %1483
  %1485 = vrot.lane.b32.xlu0 %v248, 64
  %v1486 = vpop.permute.xlu0 %1485
  %v1490 = vsel %vm958, %v1127, 0
  %v1493 = vsel %vm958, %v1128, 0
  %1495 = vmatprep.subr.mxu0 0.0
  %1496 = vmatpush1.msra.mxu0 %v1484
  %1497 = vmatprep.subr.mxu0 0.0
  %1498 = vmatpush1.msra.mxu0 %v1486
  %1499 = vmatprep.subr.mxu0 0.0
  %1500 = vmatpush1.msra.mxu0 0.0
  %1501 = vmatprep.subr.mxu0 0.0
  %1502 = vmatpush1.msra.mxu0 0.0
  %1503 = vmatprep.subr.mxu0 0.0
  %1504 = vmatpush1.msra.mxu0 0.0
  %1505 = vmatprep.subr.mxu0 0.0
  %1506 = vmatpush1.msra.mxu0 0.0
  %1507 = vmatprep.subr.mxu0 0.0
  %1508 = vmatpush1.msra.mxu0 0.0
  %1509 = vmatprep.subr.mxu0 0.0
  %1510 = vmatpush1.msra.mxu0 0.0
  %1511 = vmatprep.subr.mxu0 0.0
  %1512 = vmatpush1.msra.mxu0 0.0
  %1513 = vmatprep.subr.mxu0 0.0
  %1514 = vmatpush1.msra.mxu0 0.0
  %1515 = vmatprep.subr.mxu0 0.0
  %1516 = vmatpush1.msra.mxu0 0.0
  %1517 = vmatprep.subr.mxu0 0.0
  %1518 = vmatpush1.msra.mxu0 0.0
  %1519 = vmatprep.subr.mxu0 0.0
  %1520 = vmatpush1.msra.mxu0 0.0
  %1521 = vmatprep.subr.mxu0 0.0
  %1522 = vmatpush1.msra.mxu0 0.0
  %1523 = vmatprep.subr.mxu0 0.0
  %1524 = vmatpush1.msra.mxu0 0.0
  %1525 = vmatprep.subr.mxu0 0.0
  %1526 = vmatpush1.msra.mxu0 0.0
  %1527 = vmatprep.subr.mxu0 0.0
  %1528 = vmatpush1.msra.mxu0 0.0
  %1529 = vmatprep.subr.mxu0 0.0
  %1530 = vmatpush1.msra.mxu0 0.0
  %1531 = vmatprep.subr.mxu0 0.0
  %1532 = vmatpush1.msra.mxu0 0.0
  %1533 = vmatprep.subr.mxu0 0.0
  %1534 = vmatpush1.msra.mxu0 0.0
  %1535 = vmatprep.subr.mxu0 0.0
  %1536 = vmatpush1.msra.mxu0 0.0
  %1537 = vmatprep.subr.mxu0 0.0
  %1538 = vmatpush1.msra.mxu0 0.0
  %1539 = vmatprep.subr.mxu0 0.0
  %1540 = vmatpush1.msra.mxu0 0.0
  %1541 = vmatprep.subr.mxu0 0.0
  %1542 = vmatpush1.msra.mxu0 0.0
  %1543 = vmatprep.subr.mxu0 0.0
  %1544 = vmatpush1.msra.mxu0 0.0
  %1545 = vmatprep.subr.mxu0 0.0
  %1546 = vmatpush1.msra.mxu0 0.0
  %1547 = vmatprep.subr.mxu0 0.0
  %1548 = vmatpush1.msra.mxu0 0.0
  %1549 = vmatprep.subr.mxu0 0.0
  %1550 = vmatpush1.msra.mxu0 0.0
  %1551 = vmatprep.subr.mxu0 0.0
  %1552 = vmatpush1.msra.mxu0 0.0
  %1553 = vmatprep.subr.mxu0 0.0
  %1554 = vmatpush1.msra.mxu0 0.0
  %1555 = vmatprep.subr.mxu0 0.0
  %1556 = vmatpush1.msra.mxu0 0.0
  %1557 = vmatprep.subr.mxu0 0.0
  %1558 = vmatpush1.msra.mxu0 0.0
  %1559 = vmatprep.mubr.f32.mxu0 0.0
  %1560 = vmatmul.mubr.f32.gmra.mrb[0].mxu0 %v1490
  %v1561 = vpop.f32.mrb[0].mxu0
  %v1562 = vadd.f32 0.0, %v1561
  %v1563 = vpop.f32.mrb[0].mxu0
  %1564 = vmatprep.mubr.f32.mxu0 0.0
  %1565 = vmatmul.mubr.f32.gmra.mrb[0].mxu0 %v1493
  %v1566 = vpop.f32.mrb[0].mxu0
  %v1567 = vadd.f32 0.0, %v1566
  %v1568 = vpop.f32.mrb[0].mxu0
  %1569 = vdwg.mxu0
  %1570 = vrot.lane.b32.xlu0 %v250, 64
  %v1571 = vpop.permute.xlu0 %1570
  %1572 = vrot.lane.b32.xlu0 %v252, 64
  %v1573 = vpop.permute.xlu0 %1572
  %v1577 = vsel %vm958, %v1129, 0
  %v1580 = vsel %vm958, %v1130, 0
  %1582 = vmatprep.subr.mxu0 0.0
  %1583 = vmatpush1.msra.mxu0 %v1571
  %1584 = vmatprep.subr.mxu0 0.0
  %1585 = vmatpush1.msra.mxu0 %v1573
  %1586 = vmatprep.subr.mxu0 0.0
  %1587 = vmatpush1.msra.mxu0 0.0
  %1588 = vmatprep.subr.mxu0 0.0
  %1589 = vmatpush1.msra.mxu0 0.0
  %1590 = vmatprep.subr.mxu0 0.0
  %1591 = vmatpush1.msra.mxu0 0.0
  %1592 = vmatprep.subr.mxu0 0.0
  %1593 = vmatpush1.msra.mxu0 0.0
  %1594 = vmatprep.subr.mxu0 0.0
  %1595 = vmatpush1.msra.mxu0 0.0
  %1596 = vmatprep.subr.mxu0 0.0
  %1597 = vmatpush1.msra.mxu0 0.0
  %1598 = vmatprep.subr.mxu0 0.0
  %1599 = vmatpush1.msra.mxu0 0.0
  %1600 = vmatprep.subr.mxu0 0.0
  %1601 = vmatpush1.msra.mxu0 0.0
  %1602 = vmatprep.subr.mxu0 0.0
  %1603 = vmatpush1.msra.mxu0 0.0
  %1604 = vmatprep.subr.mxu0 0.0
  %1605 = vmatpush1.msra.mxu0 0.0
  %1606 = vmatprep.subr.mxu0 0.0
  %1607 = vmatpush1.msra.mxu0 0.0
  %1608 = vmatprep.subr.mxu0 0.0
  %1609 = vmatpush1.msra.mxu0 0.0
  %1610 = vmatprep.subr.mxu0 0.0
  %1611 = vmatpush1.msra.mxu0 0.0
  %1612 = vmatprep.subr.mxu0 0.0
  %1613 = vmatpush1.msra.mxu0 0.0
  %1614 = vmatprep.subr.mxu0 0.0
  %1615 = vmatpush1.msra.mxu0 0.0
  %1616 = vmatprep.subr.mxu0 0.0
  %1617 = vmatpush1.msra.mxu0 0.0
  %1618 = vmatprep.subr.mxu0 0.0
  %1619 = vmatpush1.msra.mxu0 0.0
  %1620 = vmatprep.subr.mxu0 0.0
  %1621 = vmatpush1.msra.mxu0 0.0
  %1622 = vmatprep.subr.mxu0 0.0
  %1623 = vmatpush1.msra.mxu0 0.0
  %1624 = vmatprep.subr.mxu0 0.0
  %1625 = vmatpush1.msra.mxu0 0.0
  %1626 = vmatprep.subr.mxu0 0.0
  %1627 = vmatpush1.msra.mxu0 0.0
  %1628 = vmatprep.subr.mxu0 0.0
  %1629 = vmatpush1.msra.mxu0 0.0
  %1630 = vmatprep.subr.mxu0 0.0
  %1631 = vmatpush1.msra.mxu0 0.0
  %1632 = vmatprep.subr.mxu0 0.0
  %1633 = vmatpush1.msra.mxu0 0.0
  %1634 = vmatprep.subr.mxu0 0.0
  %1635 = vmatpush1.msra.mxu0 0.0
  %1636 = vmatprep.subr.mxu0 0.0
  %1637 = vmatpush1.msra.mxu0 0.0
  %1638 = vmatprep.subr.mxu0 0.0
  %1639 = vmatpush1.msra.mxu0 0.0
  %1640 = vmatprep.subr.mxu0 0.0
  %1641 = vmatpush1.msra.mxu0 0.0
  %1642 = vmatprep.subr.mxu0 0.0
  %1643 = vmatpush1.msra.mxu0 0.0
  %1644 = vmatprep.subr.mxu0 0.0
  %1645 = vmatpush1.msra.mxu0 0.0
  %1646 = vmatprep.mubr.f32.mxu0 0.0
  %1647 = vmatmul.mubr.f32.gmra.mrb[0].mxu0 %v1577
  %v1648 = vpop.f32.mrb[0].mxu0
  %v1649 = vadd.f32 0.0, %v1648
  %v1650 = vpop.f32.mrb[0].mxu0
  %1651 = vmatprep.mubr.f32.mxu0 0.0
  %1652 = vmatmul.mubr.f32.gmra.mrb[0].mxu0 %v1580
  %v1653 = vpop.f32.mrb[0].mxu0
  %v1654 = vadd.f32 0.0, %v1653
  %v1655 = vpop.f32.mrb[0].mxu0
  %1656 = vdwg.mxu0
  %1657 = vrot.lane.b32.xlu0 %v254, 64
  %v1658 = vpop.permute.xlu0 %1657
  %1659 = vrot.lane.b32.xlu0 %v256, 64
  %v1660 = vpop.permute.xlu0 %1659
  %v1664 = vsel %vm958, %v1131, 0
  %v1667 = vsel %vm958, %v1132, 0
  %1669 = vmatprep.subr.mxu0 0.0
  %1670 = vmatpush1.msra.mxu0 %v1658
  %1671 = vmatprep.subr.mxu0 0.0
  %1672 = vmatpush1.msra.mxu0 %v1660
  %1673 = vmatprep.subr.mxu0 0.0
  %1674 = vmatpush1.msra.mxu0 0.0
  %1675 = vmatprep.subr.mxu0 0.0
  %1676 = vmatpush1.msra.mxu0 0.0
  %1677 = vmatprep.subr.mxu0 0.0
  %1678 = vmatpush1.msra.mxu0 0.0
  %1679 = vmatprep.subr.mxu0 0.0
  %1680 = vmatpush1.msra.mxu0 0.0
  %1681 = vmatprep.subr.mxu0 0.0
  %1682 = vmatpush1.msra.mxu0 0.0
  %1683 = vmatprep.subr.mxu0 0.0
  %1684 = vmatpush1.msra.mxu0 0.0
  %1685 = vmatprep.subr.mxu0 0.0
  %1686 = vmatpush1.msra.mxu0 0.0
  %1687 = vmatprep.subr.mxu0 0.0
  %1688 = vmatpush1.msra.mxu0 0.0
  %1689 = vmatprep.subr.mxu0 0.0
  %1690 = vmatpush1.msra.mxu0 0.0
  %1691 = vmatprep.subr.mxu0 0.0
  %1692 = vmatpush1.msra.mxu0 0.0
  %1693 = vmatprep.subr.mxu0 0.0
  %1694 = vmatpush1.msra.mxu0 0.0
  %1695 = vmatprep.subr.mxu0 0.0
  %1696 = vmatpush1.msra.mxu0 0.0
  %1697 = vmatprep.subr.mxu0 0.0
  %1698 = vmatpush1.msra.mxu0 0.0
  %1699 = vmatprep.subr.mxu0 0.0
  %1700 = vmatpush1.msra.mxu0 0.0
  %1701 = vmatprep.subr.mxu0 0.0
  %1702 = vmatpush1.msra.mxu0 0.0
  %1703 = vmatprep.subr.mxu0 0.0
  %1704 = vmatpush1.msra.mxu0 0.0
  %1705 = vmatprep.subr.mxu0 0.0
  %1706 = vmatpush1.msra.mxu0 0.0
  %1707 = vmatprep.subr.mxu0 0.0
  %1708 = vmatpush1.msra.mxu0 0.0
  %1709 = vmatprep.subr.mxu0 0.0
  %1710 = vmatpush1.msra.mxu0 0.0
  %1711 = vmatprep.subr.mxu0 0.0
  %1712 = vmatpush1.msra.mxu0 0.0
  %1713 = vmatprep.subr.mxu0 0.0
  %1714 = vmatpush1.msra.mxu0 0.0
  %1715 = vmatprep.subr.mxu0 0.0
  %1716 = vmatpush1.msra.mxu0 0.0
  %1717 = vmatprep.subr.mxu0 0.0
  %1718 = vmatpush1.msra.mxu0 0.0
  %1719 = vmatprep.subr.mxu0 0.0
  %1720 = vmatpush1.msra.mxu0 0.0
  %1721 = vmatprep.subr.mxu0 0.0
  %1722 = vmatpush1.msra.mxu0 0.0
  %1723 = vmatprep.subr.mxu0 0.0
  %1724 = vmatpush1.msra.mxu0 0.0
  %1725 = vmatprep.subr.mxu0 0.0
  %1726 = vmatpush1.msra.mxu0 0.0
  %1727 = vmatprep.subr.mxu0 0.0
  %1728 = vmatpush1.msra.mxu0 0.0
  %1729 = vmatprep.subr.mxu0 0.0
  %1730 = vmatpush1.msra.mxu0 0.0
  %1731 = vmatprep.subr.mxu0 0.0
  %1732 = vmatpush1.msra.mxu0 0.0
  %1733 = vmatprep.mubr.f32.mxu0 0.0
  %1734 = vmatmul.mubr.f32.gmra.mrb[0].mxu0 %v1664
  %v1735 = vpop.f32.mrb[0].mxu0
  %v1736 = vadd.f32 0.0, %v1735
  %v1737 = vpop.f32.mrb[0].mxu0
  %1738 = vmatprep.mubr.f32.mxu0 0.0
  %1739 = vmatmul.mubr.f32.gmra.mrb[0].mxu0 %v1667
  %v1740 = vpop.f32.mrb[0].mxu0
  %v1741 = vadd.f32 0.0, %v1740
  %v1742 = vpop.f32.mrb[0].mxu0
  %1743 = vdwg.mxu0
  %1744 = vrot.lane.b32.xlu0 %v258, 64
  %v1745 = vpop.permute.xlu0 %1744
  %1746 = vrot.lane.b32.xlu0 %v260, 64
  %v1747 = vpop.permute.xlu0 %1746
  %v1751 = vsel %vm958, %v1133, 0
  %v1754 = vsel %vm958, %v1134, 0
  %1756 = vmatprep.subr.mxu0 0.0
  %1757 = vmatpush1.msra.mxu0 %v1745
  %1758 = vmatprep.subr.mxu0 0.0
  %1759 = vmatpush1.msra.mxu0 %v1747
  %1760 = vmatprep.subr.mxu0 0.0
  %1761 = vmatpush1.msra.mxu0 0.0
  %1762 = vmatprep.subr.mxu0 0.0
  %1763 = vmatpush1.msra.mxu0 0.0
  %1764 = vmatprep.subr.mxu0 0.0
  %1765 = vmatpush1.msra.mxu0 0.0
  %1766 = vmatprep.subr.mxu0 0.0
  %1767 = vmatpush1.msra.mxu0 0.0
  %1768 = vmatprep.subr.mxu0 0.0
  %1769 = vmatpush1.msra.mxu0 0.0
  %1770 = vmatprep.subr.mxu0 0.0
  %1771 = vmatpush1.msra.mxu0 0.0
  %1772 = vmatprep.subr.mxu0 0.0
  %1773 = vmatpush1.msra.mxu0 0.0
  %1774 = vmatprep.subr.mxu0 0.0
  %1775 = vmatpush1.msra.mxu0 0.0
  %1776 = vmatprep.subr.mxu0 0.0
  %1777 = vmatpush1.msra.mxu0 0.0
  %1778 = vmatprep.subr.mxu0 0.0
  %1779 = vmatpush1.msra.mxu0 0.0
  %1780 = vmatprep.subr.mxu0 0.0
  %1781 = vmatpush1.msra.mxu0 0.0
  %1782 = vmatprep.subr.mxu0 0.0
  %1783 = vmatpush1.msra.mxu0 0.0
  %1784 = vmatprep.subr.mxu0 0.0
  %1785 = vmatpush1.msra.mxu0 0.0
  %1786 = vmatprep.subr.mxu0 0.0
  %1787 = vmatpush1.msra.mxu0 0.0
  %1788 = vmatprep.subr.mxu0 0.0
  %1789 = vmatpush1.msra.mxu0 0.0
  %1790 = vmatprep.subr.mxu0 0.0
  %1791 = vmatpush1.msra.mxu0 0.0
  %1792 = vmatprep.subr.mxu0 0.0
  %1793 = vmatpush1.msra.mxu0 0.0
  %1794 = vmatprep.subr.mxu0 0.0
  %1795 = vmatpush1.msra.mxu0 0.0
  %1796 = vmatprep.subr.mxu0 0.0
  %1797 = vmatpush1.msra.mxu0 0.0
  %1798 = vmatprep.subr.mxu0 0.0
  %1799 = vmatpush1.msra.mxu0 0.0
  %1800 = vmatprep.subr.mxu0 0.0
  %1801 = vmatpush1.msra.mxu0 0.0
  %1802 = vmatprep.subr.mxu0 0.0
  %1803 = vmatpush1.msra.mxu0 0.0
  %1804 = vmatprep.subr.mxu0 0.0
  %1805 = vmatpush1.msra.mxu0 0.0
  %1806 = vmatprep.subr.mxu0 0.0
  %1807 = vmatpush1.msra.mxu0 0.0
  %1808 = vmatprep.subr.mxu0 0.0
  %1809 = vmatpush1.msra.mxu0 0.0
  %1810 = vmatprep.subr.mxu0 0.0
  %1811 = vmatpush1.msra.mxu0 0.0
  %1812 = vmatprep.subr.mxu0 0.0
  %1813 = vmatpush1.msra.mxu0 0.0
  %1814 = vmatprep.subr.mxu0 0.0
  %1815 = vmatpush1.msra.mxu0 0.0
  %1816 = vmatprep.subr.mxu0 0.0
  %1817 = vmatpush1.msra.mxu0 0.0
  %1818 = vmatprep.subr.mxu0 0.0
  %1819 = vmatpush1.msra.mxu0 0.0
  %1820 = vmatprep.mubr.f32.mxu0 0.0
  %1821 = vmatmul.mubr.f32.gmra.mrb[0].mxu0 %v1751
  %v1822 = vpop.f32.mrb[0].mxu0
  %v1823 = vadd.f32 0.0, %v1822
  %v1824 = vpop.f32.mrb[0].mxu0
  %1825 = vmatprep.mubr.f32.mxu0 0.0
  %1826 = vmatmul.mubr.f32.gmra.mrb[0].mxu0 %v1754
  %v1827 = vpop.f32.mrb[0].mxu0
  %v1828 = vadd.f32 0.0, %v1827
  %v1829 = vpop.f32.mrb[0].mxu0
  %1830 = vdwg.mxu0
  %1835 = vrot.lane.b32.xlu0 %v1388, 8
  %v1836 = vpop.permute.xlu0 %1835
  %1837 = vrot.lane.b32.xlu0 %v1393, 8
  %v1838 = vpop.permute.xlu0 %1837
  %1839 = vrot.lane.b32.xlu0 %v1475, 8
  %v1840 = vpop.permute.xlu0 %1839
  %1841 = vrot.lane.b32.xlu0 %v1480, 8
  %v1842 = vpop.permute.xlu0 %1841
  %1851 = vrot.lane.b32.xlu0 %v1562, 16
  %v1852 = vpop.permute.xlu0 %1851
  %1853 = vrot.lane.b32.xlu0 %v1567, 16
  %v1854 = vpop.permute.xlu0 %1853
  %1855 = vrot.lane.b32.xlu0 %v1649, 16
  %v1856 = vpop.permute.xlu0 %1855
  %1857 = vrot.lane.b32.xlu0 %v1654, 16
  %v1858 = vpop.permute.xlu0 %1857
  %1867 = vrot.lane.b32.xlu0 %v1736, 24
  %v1868 = vpop.permute.xlu0 %1867
  %1869 = vrot.lane.b32.xlu0 %v1741, 24
  %v1870 = vpop.permute.xlu0 %1869
  %1871 = vrot.lane.b32.xlu0 %v1823, 24
  %v1872 = vpop.permute.xlu0 %1871
  %1873 = vrot.lane.b32.xlu0 %v1828, 24
  %v1874 = vpop.permute.xlu0 %1873
  %v1879 = vsel %vm265, %v1214, %v1836
  %v1880 = vsel %vm265, %v1219, %v1838
  %v1881 = vsel %vm265, %v1301, %v1840
  %v1882 = vsel %vm265, %v1306, %v1842
  %v1883 = vsel %vm958, %v1879, %v1852
  %v1884 = vsel %vm958, %v1880, %v1854
  %v1885 = vsel %vm958, %v1881, %v1856
  %v1886 = vsel %vm958, %v1882, %v1858
  %vm1887 = vcmask 195584
  %v1888 = vsel %vm1887, %v1883, %v1868
  %v1889 = vsel %vm1887, %v1884, %v1870
  %v1890 = vsel %vm1887, %v1885, %v1872
  %v1891 = vsel %vm1887, %v1886, %v1874
  %v1892 = vld [vmem:[%s4] sm:$0xff]
  %v1893 = vld [vmem:[%s4 + $0x8] sm:$0xff]
  %v1894 = vld [vmem:[%s4 + $0x10] sm:$0xff]
  %v1895 = vld [vmem:[%s4 + $0x18] sm:$0xff]
  %v1897 = vsel %vm135, %v1888, 0
  %v1900 = vsel %vm135, %v1889, 0
  %v1903 = vsel %vm135, %v1890, 0
  %v1906 = vsel %vm135, %v1891, 0
  %1908 = vmatprep.subr.mxu0 0.0
  %1909 = vmatpush1.msra.mxu0 %v1892
  %1910 = vmatprep.subr.mxu0 0.0
  %1911 = vmatpush1.msra.mxu0 %v1893
  %1912 = vmatprep.subr.mxu0 0.0
  %1913 = vmatpush1.msra.mxu0 %v1894
  %1914 = vmatprep.subr.mxu0 0.0
  %1915 = vmatpush1.msra.mxu0 %v1895
  %1916 = vmatprep.subr.mxu0 0.0
  %1917 = vmatpush1.msra.mxu0 0.0
  %1918 = vmatprep.subr.mxu0 0.0
  %1919 = vmatpush1.msra.mxu0 0.0
  %1920 = vmatprep.subr.mxu0 0.0
  %1921 = vmatpush1.msra.mxu0 0.0
  %1922 = vmatprep.subr.mxu0 0.0
  %1923 = vmatpush1.msra.mxu0 0.0
  %1924 = vmatprep.subr.mxu0 0.0
  %1925 = vmatpush1.msra.mxu0 0.0
  %1926 = vmatprep.subr.mxu0 0.0
  %1927 = vmatpush1.msra.mxu0 0.0
  %1928 = vmatprep.subr.mxu0 0.0
  %1929 = vmatpush1.msra.mxu0 0.0
  %1930 = vmatprep.subr.mxu0 0.0
  %1931 = vmatpush1.msra.mxu0 0.0
  %1932 = vmatprep.subr.mxu0 0.0
  %1933 = vmatpush1.msra.mxu0 0.0
  %1934 = vmatprep.subr.mxu0 0.0
  %1935 = vmatpush1.msra.mxu0 0.0
  %1936 = vmatprep.subr.mxu0 0.0
  %1937 = vmatpush1.msra.mxu0 0.0
  %1938 = vmatprep.subr.mxu0 0.0
  %1939 = vmatpush1.msra.mxu0 0.0
  %1940 = vmatprep.subr.mxu0 0.0
  %1941 = vmatpush1.msra.mxu0 0.0
  %1942 = vmatprep.subr.mxu0 0.0
  %1943 = vmatpush1.msra.mxu0 0.0
  %1944 = vmatprep.subr.mxu0 0.0
  %1945 = vmatpush1.msra.mxu0 0.0
  %1946 = vmatprep.subr.mxu0 0.0
  %1947 = vmatpush1.msra.mxu0 0.0
  %1948 = vmatprep.subr.mxu0 0.0
  %1949 = vmatpush1.msra.mxu0 0.0
  %1950 = vmatprep.subr.mxu0 0.0
  %1951 = vmatpush1.msra.mxu0 0.0
  %1952 = vmatprep.subr.mxu0 0.0
  %1953 = vmatpush1.msra.mxu0 0.0
  %1954 = vmatprep.subr.mxu0 0.0
  %1955 = vmatpush1.msra.mxu0 0.0
  %1956 = vmatprep.subr.mxu0 0.0
  %1957 = vmatpush1.msra.mxu0 0.0
  %1958 = vmatprep.subr.mxu0 0.0
  %1959 = vmatpush1.msra.mxu0 0.0
  %1960 = vmatprep.subr.mxu0 0.0
  %1961 = vmatpush1.msra.mxu0 0.0
  %1962 = vmatprep.subr.mxu0 0.0
  %1963 = vmatpush1.msra.mxu0 0.0
  %1964 = vmatprep.subr.mxu0 0.0
  %1965 = vmatpush1.msra.mxu0 0.0
  %1966 = vmatprep.subr.mxu0 0.0
  %1967 = vmatpush1.msra.mxu0 0.0
  %1968 = vmatprep.subr.mxu0 0.0
  %1969 = vmatpush1.msra.mxu0 0.0
  %1970 = vmatprep.subr.mxu0 0.0
  %1971 = vmatpush1.msra.mxu0 0.0
  %1972 = vmatprep.mubr.f32.mxu0 0.0
  %1973 = vmatmul.mubr.f32.gmra.mrb[0].mxu0 %v1897
  %v1974 = vpop.f32.mrb[0].mxu0
  %v1975 = vadd.f32 0.0, %v1974
  %v1976 = vpop.f32.mrb[0].mxu0
  %1977 = vmatprep.mubr.f32.mxu0 0.0
  %1978 = vmatmul.mubr.f32.gmra.mrb[0].mxu0 %v1900
  %v1979 = vpop.f32.mrb[0].mxu0
  %v1980 = vadd.f32 0.0, %v1979
  %v1981 = vpop.f32.mrb[0].mxu0
  %1982 = vmatprep.mubr.f32.mxu0 0.0
  %1983 = vmatmul.mubr.f32.gmra.mrb[0].mxu0 %v1903
  %v1984 = vpop.f32.mrb[0].mxu0
  %v1985 = vadd.f32 0.0, %v1984
  %v1986 = vpop.f32.mrb[0].mxu0
  %1987 = vmatprep.mubr.f32.mxu0 0.0
  %1988 = vmatmul.mubr.f32.gmra.mrb[0].mxu0 %v1906
  %v1989 = vpop.f32.mrb[0].mxu0
  %v1990 = vadd.f32 0.0, %v1989
  %v1991 = vpop.f32.mrb[0].mxu0
  %1992 = vdwg.mxu0
  %1994 = vrot.lane.b32.xlu0 %v1980, 32
  %v1995 = vpop.permute.xlu0 %1994
  %1998 = vrot.lane.b32.xlu0 %v1985, 64
  %v1999 = vpop.permute.xlu0 %1998
  %2002 = vrot.lane.b32.xlu0 %v1990, 96
  %v2003 = vpop.permute.xlu0 %2002
  %v2005 = vsel %vm135, %v1975, %v1995
  %vm2006 = vcmask 523264
  %v2007 = vsel %vm2006, %v2005, %v1999
  %vm2008 = vcmask 785408
  %v2009 = vsel %vm2008, %v2007, %v2003
  %2010 = vst [vmem:[%s5] sm:$0xff] %v2009
  // Predicated region
  $region22: #{image_encoder.1} parent=0 // pred_check
    _
  $region23: #{image_encoder.1} parent=0 // pred_check_branch
    %2012 = sbr.rel (0) target = $region25
  $region24: #{image_encoder.1} parent=0 // pred_region
    _
  $region25: #{image_encoder.1} parent=0 // pred_fallthru
    _
  // Predicated region
  $region26: #{image_encoder.1} parent=0 // pred_check
    _
  $region27: #{image_encoder.1} parent=0 // pred_check_branch
    %2014 = sbr.rel (0) target = $region29
  $region28: #{image_encoder.1} parent=0 // pred_region
    _
  $region29: #{image_encoder.1} parent=0 // pred_fallthru
    _

</llo_original>
